<compile_context>
chip_gen: v6e
topology: v6e:2x2x1
jax: 0.10.0
libtpu: 0.0.40
codegen_flags: <defaults>
</compile_context>

<pallas_src>
import functools
import math

import jax
import jax.numpy as jnp
from jax.experimental import pallas as pl
from jax.experimental.pallas import tpu as pltpu

THETA = 0.8


# ---------------------------------------------------------------------------
# Fused Pallas kernel (block_n images per grid step)
# ---------------------------------------------------------------------------

def _feature_extract_kernel(x_ref, w1_ref, b1_ref, w3_ref, mask_ref, o_ref,
                            patches_ref, *, H, W, Cmid, block_n):
    HW = H * W
    BHW = block_n * HW
    K9 = 9 * Cmid
    Kp = patches_ref.shape[0]                 # K9 + bias row, padded to 8 rows

    # Bias-fold rows: row K9 multiplies the bias column of each packed weight;
    # rows K9+1..Kp-1 multiply zero weight columns, so their value (1) is inert.
    patches_ref[pl.ds(K9, Kp - K9), :] = jnp.ones((Kp - K9, BHW), jnp.float32)

    # 1x1 conv: (Cmid, Cin) @ (Cin, BHW) + bias   (lanes = image-major spatial)
    h = (jnp.dot(w1_ref[...], x_ref[...], preferred_element_type=jnp.float32)
         + b1_ref[...])

    def build_patches(a):
        """im2col of `a` (3x3, stride 1, pad 1) written straight into VMEM scratch."""
        for k in range(9):
            dy, dx = k // 3 - 1, k % 3 - 1
            s = (-(dy * W + dx)) % BHW
            tap = pltpu.roll(a, shift=s, axis=1) if s != 0 else a
            if k != 4:                        # center tap never crosses a border
                tap = tap * mask_ref[k]       # precomputed (Cmid, BHW) mask
            patches_ref[pl.ds(k * Cmid, Cmid), :] = tap

    def edge_block(a, b):
        w = w3_ref[b]                                           # (4*Cmid, Kp)
        build_patches(a)
        p = jnp.dot(w[0:Cmid], patches_ref[...],                # process conv
                    preferred_element_type=jnp.float32)
        build_patches(p)                                        # shared im2col
        rc = jnp.dot(w[Cmid:3 * Cmid], patches_ref[...],        # res1 + cdc stacked
                     preferred_element_type=jnp.float32)
        r1 = jnp.maximum(rc[0:Cmid], 0.0)                       # res1 -> ReLU
        cdc = rc[Cmid:2 * Cmid]                                 # cdc (center-tap fold)
        build_patches(r1)
        res = jnp.dot(w[3 * Cmid:4 * Cmid], patches_ref[...],   # res2 conv
                      preferred_element_type=jnp.float32)
        return res + cdc

    h = edge_block(h, 0)
    h = edge_block(h, 1)
    o_ref[...] = h


# ---------------------------------------------------------------------------
# Wrapper: weight packing (cdc fold, bias column, tap-major im2col layout)
# ---------------------------------------------------------------------------

def _pack_conv3(w, b, Kp):
    """OIHW (Co,Ci,3,3) + bias -> (Co, Kp): cols [(ky*3+kx)*Ci + ci | bias | 0]."""
    co, ci = w.shape[0], w.shape[1]
    taps = jnp.transpose(w, (0, 2, 3, 1)).reshape(co, 9 * ci).astype(jnp.float32)
    out = jnp.zeros((co, Kp), jnp.float32)
    out = out.at[:, :9 * ci].set(taps)
    out = out.at[:, 9 * ci].set(b.astype(jnp.float32))
    return out


def _fold_cdc(w, theta):
    """Fold -theta * conv1x1(x, sum_hw(w)) exactly into the 3x3 center tap."""
    return w.at[:, :, 1, 1].add(-theta * jnp.sum(w, axis=(2, 3)))


def _border_masks(H, W, block_n, Cmid):
    """(9, Cmid, block_n*H*W) f32 validity mask per 3x3 tap (per image)."""
    pos = jnp.arange(block_n * H * W) % (H * W)      # per-image position
    row, col = pos // W, pos % W
    rows = []
    for k in range(9):
        dy, dx = k // 3 - 1, k % 3 - 1
        valid = ((row + dy >= 0) & (row + dy < H)
                 & (col + dx >= 0) & (col + dx < W))
        rows.append(valid.astype(jnp.float32))
    m = jnp.stack(rows)                              # (9, BHW)
    return jnp.broadcast_to(m[:, None, :], (9, Cmid, block_n * H * W))


def feature_extract_forward(params, x_nchw, theta=THETA, block_n=None):
    N, Cin, H, W = x_nchw.shape
    HW = H * W
    Cmid = params['conv'][0].shape[0]
    K9 = 9 * Cmid
    Kp = ((K9 + 1 + 7) // 8) * 8                     # bias column, sublane-padded

    if block_n is None:
        # keep >= 2 grid steps when possible so v7x shards the batch across its
        # two TensorCores; this is a no-op on single-core v5e/v6e.
        block_n = N // 2 if (N >= 4 and N % 2 == 0) else 1
    assert N % block_n == 0
    BHW = block_n * HW
    steps = N // block_n

    # ---- weights ----------------------------------------------------------
    w1 = params['conv'][0].reshape(Cmid, Cin).astype(jnp.float32)
    b1 = params['conv'][1].reshape(Cmid, 1).astype(jnp.float32)

    zeros_b = jnp.zeros((Cmid,), jnp.float32)
    blocks = []
    for blk in ('block1', 'block2'):
        bp = params[blk]
        w_proc = _pack_conv3(bp['process'][0], bp['process'][1], Kp)
        w_res1 = _pack_conv3(bp['res1'][0], bp['res1'][1], Kp)
        w_cdc = _pack_conv3(_fold_cdc(bp['cdc'][0], theta), zeros_b, Kp)
        w_res2 = _pack_conv3(bp['res2'][0], bp['res2'][1], Kp)
        # row layout: [process | res1 ; cdc (share one im2col) | res2]
        blocks.append(jnp.concatenate([w_proc, w_res1, w_cdc, w_res2], axis=0))
    w3 = jnp.stack(blocks)                           # (2, 4*Cmid, Kp)

    mask = _border_masks(H, W, block_n, Cmid)        # (9, Cmid, BHW)

    # ---- activations: channels on sublanes, image-major spatial on lanes ---
    x = (x_nchw.reshape(N, Cin, HW).transpose(1, 0, 2)
         .reshape(Cin, N * HW).astype(jnp.float32))

    kernel = functools.partial(_feature_extract_kernel,
                               H=H, W=W, Cmid=Cmid, block_n=block_n)
    out = pl.pallas_call(
        kernel,
        out_shape=jax.ShapeDtypeStruct((Cmid, N * HW), jnp.float32),
        grid=(steps,),
        in_specs=[
            pl.BlockSpec((Cin, BHW), lambda n: (0, n)),
            pl.BlockSpec((Cmid, Cin), lambda n: (0, 0)),
            pl.BlockSpec((Cmid, 1), lambda n: (0, 0)),
            pl.BlockSpec((2, 4 * Cmid, Kp), lambda n: (0, 0, 0)),
            pl.BlockSpec((9, Cmid, BHW), lambda n: (0, 0, 0)),
        ],
        out_specs=pl.BlockSpec((Cmid, BHW), lambda n: (0, n)),
        scratch_shapes=[pltpu.VMEM((Kp, BHW), jnp.float32)],
        compiler_params=pltpu.CompilerParams(
            dimension_semantics=("parallel",)),
    )(x, w1, b1, w3, mask)

    return (out.reshape(Cmid, N, HW).transpose(1, 0, 2)
            .reshape(N, Cmid, H, W))


# ---------------------------------------------------------------------------
# Parameter construction (deterministic, PyTorch-Conv2d-like uniform init)
# ---------------------------------------------------------------------------

def _uniform(key, shape, bound):
    return jax.random.uniform(key, shape, jnp.float32, -bound, bound)


def init_feature_extract_params(key, channelin, channelout):
    keys = iter(jax.random.split(key, 16))

    def conv(ci, co, k, bias=True):
        bound = 1.0 / math.sqrt(ci * k * k)
        w = _uniform(next(keys), (co, ci, k, k), bound)       # OIHW like nn.Conv2d
        b = (_uniform(next(keys), (co,), bound) if bias
             else jnp.zeros((co,), jnp.float32))
        return w, b

    params = {'conv': conv(channelin, channelout, 1)}
    for blk in ('block1', 'block2'):
        params[blk] = {
            'process': conv(channelout, channelout, 3),
            'res1': conv(channelout, channelout, 3),
            'res2': conv(channelout, channelout, 3),
            'cdc': conv(channelout, channelout, 3, bias=False),
        }
    return params


# ---------------------------------------------------------------------------
# Pure-XLA reference (validation only)
# ---------------------------------------------------------------------------

def _ref_conv2d(x, w, b, padding):
    y = jax.lax.conv_general_dilated(
        x, w, window_strides=(1, 1), padding=padding,
        dimension_numbers=('NCHW', 'OIHW', 'NCHW'))
    return y + b.reshape(1, -1, 1, 1)


def feature_extract_reference(params, x, theta=THETA):
    w, b = params['conv']
    xf = _ref_conv2d(x, w, b, 'VALID')
    for blk in ('block1', 'block2'):
        bp = params[blk]
        a = _ref_conv2d(xf, bp['process'][0], bp['process'][1], 'SAME')
        r = _ref_conv2d(
            jnp.maximum(_ref_conv2d(a, bp['res1'][0], bp['res1'][1], 'SAME'), 0.0),
            bp['res2'][0], bp['res2'][1], 'SAME')
        wc = bp['cdc'][0]
        zero_b = jnp.zeros((wc.shape[0],), jnp.float32)
        c = (_ref_conv2d(a, wc, zero_b, 'SAME')
             - theta * _ref_conv2d(a, jnp.sum(wc, axis=(2, 3))[:, :, None, None],
                                   zero_b, 'VALID'))
        xf = r + c
    return xf


# ---------------------------------------------------------------------------

if __name__ == "__main__":
    key = jax.random.PRNGKey(0)
    kp, kx = jax.random.split(key)

    N, Cin, Cout, H, W = 2, 4, 8, 16, 16
    params = init_feature_extract_params(kp, Cin, Cout)
    x = jax.random.normal(kx, (N, Cin, H, W), jnp.float32)

    out = jax.block_until_ready(jax.jit(feature_extract_forward)(params, x))

    assert out.shape == (N, Cout, H, W)
    assert bool(jnp.all(jnp.isfinite(out)))

    ref = feature_extract_reference(params, x)
    max_err = float(jnp.max(jnp.abs(out - ref)))
    assert max_err < 1e-3, f"Pallas vs XLA reference mismatch: max abs err = {max_err}"

    print("KERNEL_OK")
</pallas_src>

<mosaic_0001>
module attributes {stable_mosaic.version = 11 : i64} {
  func.func @_feature_extract_kernel(%arg0: i32, %arg1: memref<4x256xf32, #tpu.memory_space<vmem>>, %arg2: memref<8x4xf32, #tpu.memory_space<vmem>>, %arg3: memref<8x1xf32, #tpu.memory_space<vmem>>, %arg4: memref<2x32x80xf32, #tpu.memory_space<vmem>>, %arg5: memref<9x8x256xf32, #tpu.memory_space<vmem>>, %arg6: memref<8x256xf32, #tpu.memory_space<vmem>>, %arg7: memref<80x256xf32, #tpu.memory_space<vmem>>) attributes {dimension_semantics = [#tpu.dimension_semantics<parallel>], iteration_bounds = array<i64: 2>, scalar_prefetch = 0 : i64, scratch_operands = 1 : i64, tpu.core_type = #tpu.core_type<tc>, window_params = [{transform_indices = @transform_0, window_bounds = array<i64: 4, 256>}, {pipeline_mode = #tpu.pipeline_mode<synchronous>, transform_indices = @transform_1, window_bounds = array<i64: 8, 4>}, {pipeline_mode = #tpu.pipeline_mode<synchronous>, transform_indices = @transform_2, window_bounds = array<i64: 8, 1>}, {pipeline_mode = #tpu.pipeline_mode<synchronous>, transform_indices = @transform_3, window_bounds = array<i64: 2, 32, 80>}, {pipeline_mode = #tpu.pipeline_mode<synchronous>, transform_indices = @transform_4, window_bounds = array<i64: 9, 8, 256>}, {transform_indices = @transform_5, window_bounds = array<i64: 8, 256>}]} {
    %cst = arith.constant 1.000000e+00 : f32
    %0 = vector.broadcast %cst : f32 to vector<8x256xf32>
    %c72 = arith.constant 72 : index
    %c0 = arith.constant 0 : index
    %1 = vector.load %arg7[%c72, %c0] : memref<80x256xf32, #tpu.memory_space<vmem>>, vector<8x256xf32>
    tpu.vector_store %arg7[%c72, %c0], %0 {strides = array<i32>} : memref<80x256xf32, #tpu.memory_space<vmem>>, vector<8x256xf32>,
    %c0_0 = arith.constant 0 : index
    %c0_1 = arith.constant 0 : index
    %2 = vector.load %arg2[%c0_0, %c0_1] : memref<8x4xf32, #tpu.memory_space<vmem>>, vector<8x4xf32>
    %c0_2 = arith.constant 0 : index
    %c0_3 = arith.constant 0 : index
    %3 = vector.load %arg1[%c0_2, %c0_3] : memref<4x256xf32, #tpu.memory_space<vmem>>, vector<4x256xf32>
    %cst_4 = arith.constant dense<0.000000e+00> : vector<8x256xf32>
    %4 = tpu.matmul %2, %3, %cst_4 {dimension_numbers = #tpu.dot_dimension_numbers<[1], [0], [0], [1], [0, 0, 1, 1], [], []>} : vector<8x4xf32>, vector<4x256xf32>, vector<8x256xf32> -> vector<8x256xf32>
    %c0_5 = arith.constant 0 : index
    %c0_6 = arith.constant 0 : index
    %5 = vector.load %arg3[%c0_5, %c0_6] : memref<8x1xf32, #tpu.memory_space<vmem>>, vector<8x1xf32>
    %6 = vector.broadcast %5 : vector<8x1xf32> to vector<8x256xf32>
    %7 = arith.addf %4, %6 : vector<8x256xf32>
    %c0_7 = arith.constant 0 : index
    %c0_8 = arith.constant 0 : index
    %c0_9 = arith.constant 0 : index
    %8 = vector.load %arg4[%c0_7, %c0_8, %c0_9] : memref<2x32x80xf32, #tpu.memory_space<vmem>>, vector<1x32x80xf32>
    %9 = vector.shape_cast %8 : vector<1x32x80xf32> to vector<32x80xf32>
    %c17_i32 = arith.constant 17 : i32
    %10 = tpu.dynamic_rotate %7 by %c17_i32 dim 1 : vector<8x256xf32>, i32 -> vector<8x256xf32>
    %c0_10 = arith.constant 0 : index
    %c0_11 = arith.constant 0 : index
    %c0_12 = arith.constant 0 : index
    %11 = vector.load %arg5[%c0_10, %c0_11, %c0_12] : memref<9x8x256xf32, #tpu.memory_space<vmem>>, vector<1x8x256xf32>
    %12 = vector.shape_cast %11 : vector<1x8x256xf32> to vector<8x256xf32>
    %13 = arith.mulf %10, %12 : vector<8x256xf32>
    %c0_13 = arith.constant 0 : index
    %c0_14 = arith.constant 0 : index
    %14 = vector.load %arg7[%c0_13, %c0_14] : memref<80x256xf32, #tpu.memory_space<vmem>>, vector<8x256xf32>
    tpu.vector_store %arg7[%c0_13, %c0_14], %13 {strides = array<i32>} : memref<80x256xf32, #tpu.memory_space<vmem>>, vector<8x256xf32>,
    %c16_i32 = arith.constant 16 : i32
    %15 = tpu.dynamic_rotate %7 by %c16_i32 dim 1 : vector<8x256xf32>, i32 -> vector<8x256xf32>
    %c1 = arith.constant 1 : index
    %c0_15 = arith.constant 0 : index
    %c0_16 = arith.constant 0 : index
    %16 = vector.load %arg5[%c1, %c0_15, %c0_16] : memref<9x8x256xf32, #tpu.memory_space<vmem>>, vector<1x8x256xf32>
    %17 = vector.shape_cast %16 : vector<1x8x256xf32> to vector<8x256xf32>
    %18 = arith.mulf %15, %17 : vector<8x256xf32>
    %c8 = arith.constant 8 : index
    %c0_17 = arith.constant 0 : index
    %19 = vector.load %arg7[%c8, %c0_17] : memref<80x256xf32, #tpu.memory_space<vmem>>, vector<8x256xf32>
    tpu.vector_store %arg7[%c8, %c0_17], %18 {strides = array<i32>} : memref<80x256xf32, #tpu.memory_space<vmem>>, vector<8x256xf32>,
    %c15_i32 = arith.constant 15 : i32
    %20 = tpu.dynamic_rotate %7 by %c15_i32 dim 1 : vector<8x256xf32>, i32 -> vector<8x256xf32>
    %c2 = arith.constant 2 : index
    %c0_18 = arith.constant 0 : index
    %c0_19 = arith.constant 0 : index
    %21 = vector.load %arg5[%c2, %c0_18, %c0_19] : memref<9x8x256xf32, #tpu.memory_space<vmem>>, vector<1x8x256xf32>
    %22 = vector.shape_cast %21 : vector<1x8x256xf32> to vector<8x256xf32>
    %23 = arith.mulf %20, %22 : vector<8x256xf32>
    %c16 = arith.constant 16 : index
    %c0_20 = arith.constant 0 : index
    %24 = vector.load %arg7[%c16, %c0_20] : memref<80x256xf32, #tpu.memory_space<vmem>>, vector<8x256xf32>
    tpu.vector_store %arg7[%c16, %c0_20], %23 {strides = array<i32>} : memref<80x256xf32, #tpu.memory_space<vmem>>, vector<8x256xf32>,
    %c1_i32 = arith.constant 1 : i32
    %25 = tpu.dynamic_rotate %7 by %c1_i32 dim 1 : vector<8x256xf32>, i32 -> vector<8x256xf32>
    %c3 = arith.constant 3 : index
    %c0_21 = arith.constant 0 : index
    %c0_22 = arith.constant 0 : index
    %26 = vector.load %arg5[%c3, %c0_21, %c0_22] : memref<9x8x256xf32, #tpu.memory_space<vmem>>, vector<1x8x256xf32>
    %27 = vector.shape_cast %26 : vector<1x8x256xf32> to vector<8x256xf32>
    %28 = arith.mulf %25, %27 : vector<8x256xf32>
    %c24 = arith.constant 24 : index
    %c0_23 = arith.constant 0 : index
    %29 = vector.load %arg7[%c24, %c0_23] : memref<80x256xf32, #tpu.memory_space<vmem>>, vector<8x256xf32>
    tpu.vector_store %arg7[%c24, %c0_23], %28 {strides = array<i32>} : memref<80x256xf32, #tpu.memory_space<vmem>>, vector<8x256xf32>,
    %c32 = arith.constant 32 : index
    %c0_24 = arith.constant 0 : index
    %30 = vector.load %arg7[%c32, %c0_24] : memref<80x256xf32, #tpu.memory_space<vmem>>, vector<8x256xf32>
    tpu.vector_store %arg7[%c32, %c0_24], %7 {strides = array<i32>} : memref<80x256xf32, #tpu.memory_space<vmem>>, vector<8x256xf32>,
    %c255_i32 = arith.constant 255 : i32
    %31 = tpu.dynamic_rotate %7 by %c255_i32 dim 1 : vector<8x256xf32>, i32 -> vector<8x256xf32>
    %c5 = arith.constant 5 : index
    %c0_25 = arith.constant 0 : index
    %c0_26 = arith.constant 0 : index
    %32 = vector.load %arg5[%c5, %c0_25, %c0_26] : memref<9x8x256xf32, #tpu.memory_space<vmem>>, vector<1x8x256xf32>
    %33 = vector.shape_cast %32 : vector<1x8x256xf32> to vector<8x256xf32>
    %34 = arith.mulf %31, %33 : vector<8x256xf32>
    %c40 = arith.constant 40 : index
    %c0_27 = arith.constant 0 : index
    %35 = vector.load %arg7[%c40, %c0_27] : memref<80x256xf32, #tpu.memory_space<vmem>>, vector<8x256xf32>
    tpu.vector_store %arg7[%c40, %c0_27], %34 {strides = array<i32>} : memref<80x256xf32, #tpu.memory_space<vmem>>, vector<8x256xf32>,
    %c241_i32 = arith.constant 241 : i32
    %36 = tpu.dynamic_rotate %7 by %c241_i32 dim 1 : vector<8x256xf32>, i32 -> vector<8x256xf32>
    %c6 = arith.constant 6 : index
    %c0_28 = arith.constant 0 : index
    %c0_29 = arith.constant 0 : index
    %37 = vector.load %arg5[%c6, %c0_28, %c0_29] : memref<9x8x256xf32, #tpu.memory_space<vmem>>, vector<1x8x256xf32>
    %38 = vector.shape_cast %37 : vector<1x8x256xf32> to vector<8x256xf32>
    %39 = arith.mulf %36, %38 : vector<8x256xf32>
    %c48 = arith.constant 48 : index
    %c0_30 = arith.constant 0 : index
    %40 = vector.load %arg7[%c48, %c0_30] : memref<80x256xf32, #tpu.memory_space<vmem>>, vector<8x256xf32>
    tpu.vector_store %arg7[%c48, %c0_30], %39 {strides = array<i32>} : memref<80x256xf32, #tpu.memory_space<vmem>>, vector<8x256xf32>,
    %c240_i32 = arith.constant 240 : i32
    %41 = tpu.dynamic_rotate %7 by %c240_i32 dim 1 : vector<8x256xf32>, i32 -> vector<8x256xf32>
    %c7 = arith.constant 7 : index
    %c0_31 = arith.constant 0 : index
    %c0_32 = arith.constant 0 : index
    %42 = vector.load %arg5[%c7, %c0_31, %c0_32] : memref<9x8x256xf32, #tpu.memory_space<vmem>>, vector<1x8x256xf32>
    %43 = vector.shape_cast %42 : vector<1x8x256xf32> to vector<8x256xf32>
    %44 = arith.mulf %41, %43 : vector<8x256xf32>
    %c56 = arith.constant 56 : index
    %c0_33 = arith.constant 0 : index
    %45 = vector.load %arg7[%c56, %c0_33] : memref<80x256xf32, #tpu.memory_space<vmem>>, vector<8x256xf32>
    tpu.vector_store %arg7[%c56, %c0_33], %44 {strides = array<i32>} : memref<80x256xf32, #tpu.memory_space<vmem>>, vector<8x256xf32>,
    %c239_i32 = arith.constant 239 : i32
    %46 = tpu.dynamic_rotate %7 by %c239_i32 dim 1 : vector<8x256xf32>, i32 -> vector<8x256xf32>
    %c8_34 = arith.constant 8 : index
    %c0_35 = arith.constant 0 : index
    %c0_36 = arith.constant 0 : index
    %47 = vector.load %arg5[%c8_34, %c0_35, %c0_36] : memref<9x8x256xf32, #tpu.memory_space<vmem>>, vector<1x8x256xf32>
    %48 = vector.shape_cast %47 : vector<1x8x256xf32> to vector<8x256xf32>
    %49 = arith.mulf %46, %48 : vector<8x256xf32>
    %c64 = arith.constant 64 : index
    %c0_37 = arith.constant 0 : index
    %50 = vector.load %arg7[%c64, %c0_37] : memref<80x256xf32, #tpu.memory_space<vmem>>, vector<8x256xf32>
    tpu.vector_store %arg7[%c64, %c0_37], %49 {strides = array<i32>} : memref<80x256xf32, #tpu.memory_space<vmem>>, vector<8x256xf32>,
    %51 = vector.extract_strided_slice %9 {offsets = [0, 0], sizes = [8, 80], strides = [1, 1]} : vector<32x80xf32> to vector<8x80xf32>
    %c0_38 = arith.constant 0 : index
    %c0_39 = arith.constant 0 : index
    %52 = vector.load %arg7[%c0_38, %c0_39] : memref<80x256xf32, #tpu.memory_space<vmem>>, vector<80x256xf32>
    %cst_40 = arith.constant dense<0.000000e+00> : vector<8x256xf32>
    %53 = tpu.matmul %51, %52, %cst_40 {dimension_numbers = #tpu.dot_dimension_numbers<[1], [0], [0], [1], [0, 0, 1, 1], [], []>} : vector<8x80xf32>, vector<80x256xf32>, vector<8x256xf32> -> vector<8x256xf32>
    %c17_i32_41 = arith.constant 17 : i32
    %54 = tpu.dynamic_rotate %53 by %c17_i32_41 dim 1 : vector<8x256xf32>, i32 -> vector<8x256xf32>
    %c0_42 = arith.constant 0 : index
    %c0_43 = arith.constant 0 : index
    %c0_44 = arith.constant 0 : index
    %55 = vector.load %arg5[%c0_42, %c0_43, %c0_44] : memref<9x8x256xf32, #tpu.memory_space<vmem>>, vector<1x8x256xf32>
    %56 = vector.shape_cast %55 : vector<1x8x256xf32> to vector<8x256xf32>
    %57 = arith.mulf %54, %56 : vector<8x256xf32>
    %c0_45 = arith.constant 0 : index
    %c0_46 = arith.constant 0 : index
    %58 = vector.load %arg7[%c0_45, %c0_46] : memref<80x256xf32, #tpu.memory_space<vmem>>, vector<8x256xf32>
    tpu.vector_store %arg7[%c0_45, %c0_46], %57 {strides = array<i32>} : memref<80x256xf32, #tpu.memory_space<vmem>>, vector<8x256xf32>,
    %c16_i32_47 = arith.constant 16 : i32
    %59 = tpu.dynamic_rotate %53 by %c16_i32_47 dim 1 : vector<8x256xf32>, i32 -> vector<8x256xf32>
    %c1_48 = arith.constant 1 : index
    %c0_49 = arith.constant 0 : index
    %c0_50 = arith.constant 0 : index
    %60 = vector.load %arg5[%c1_48, %c0_49, %c0_50] : memref<9x8x256xf32, #tpu.memory_space<vmem>>, vector<1x8x256xf32>
    %61 = vector.shape_cast %60 : vector<1x8x256xf32> to vector<8x256xf32>
    %62 = arith.mulf %59, %61 : vector<8x256xf32>
    %c8_51 = arith.constant 8 : index
    %c0_52 = arith.constant 0 : index
    %63 = vector.load %arg7[%c8_51, %c0_52] : memref<80x256xf32, #tpu.memory_space<vmem>>, vector<8x256xf32>
    tpu.vector_store %arg7[%c8_51, %c0_52], %62 {strides = array<i32>} : memref<80x256xf32, #tpu.memory_space<vmem>>, vector<8x256xf32>,
    %c15_i32_53 = arith.constant 15 : i32
    %64 = tpu.dynamic_rotate %53 by %c15_i32_53 dim 1 : vector<8x256xf32>, i32 -> vector<8x256xf32>
    %c2_54 = arith.constant 2 : index
    %c0_55 = arith.constant 0 : index
    %c0_56 = arith.constant 0 : index
    %65 = vector.load %arg5[%c2_54, %c0_55, %c0_56] : memref<9x8x256xf32, #tpu.memory_space<vmem>>, vector<1x8x256xf32>
    %66 = vector.shape_cast %65 : vector<1x8x256xf32> to vector<8x256xf32>
    %67 = arith.mulf %64, %66 : vector<8x256xf32>
    %c16_57 = arith.constant 16 : index
    %c0_58 = arith.constant 0 : index
    %68 = vector.load %arg7[%c16_57, %c0_58] : memref<80x256xf32, #tpu.memory_space<vmem>>, vector<8x256xf32>
    tpu.vector_store %arg7[%c16_57, %c0_58], %67 {strides = array<i32>} : memref<80x256xf32, #tpu.memory_space<vmem>>, vector<8x256xf32>,
    %c1_i32_59 = arith.constant 1 : i32
    %69 = tpu.dynamic_rotate %53 by %c1_i32_59 dim 1 : vector<8x256xf32>, i32 -> vector<8x256xf32>
    %c3_60 = arith.constant 3 : index
    %c0_61 = arith.constant 0 : index
    %c0_62 = arith.constant 0 : index
    %70 = vector.load %arg5[%c3_60, %c0_61, %c0_62] : memref<9x8x256xf32, #tpu.memory_space<vmem>>, vector<1x8x256xf32>
    %71 = vector.shape_cast %70 : vector<1x8x256xf32> to vector<8x256xf32>
    %72 = arith.mulf %69, %71 : vector<8x256xf32>
    %c24_63 = arith.constant 24 : index
    %c0_64 = arith.constant 0 : index
    %73 = vector.load %arg7[%c24_63, %c0_64] : memref<80x256xf32, #tpu.memory_space<vmem>>, vector<8x256xf32>
    tpu.vector_store %arg7[%c24_63, %c0_64], %72 {strides = array<i32>} : memref<80x256xf32, #tpu.memory_space<vmem>>, vector<8x256xf32>,
    %c32_65 = arith.constant 32 : index
    %c0_66 = arith.constant 0 : index
    %74 = vector.load %arg7[%c32_65, %c0_66] : memref<80x256xf32, #tpu.memory_space<vmem>>, vector<8x256xf32>
    tpu.vector_store %arg7[%c32_65, %c0_66], %53 {strides = array<i32>} : memref<80x256xf32, #tpu.memory_space<vmem>>, vector<8x256xf32>,
    %c255_i32_67 = arith.constant 255 : i32
    %75 = tpu.dynamic_rotate %53 by %c255_i32_67 dim 1 : vector<8x256xf32>, i32 -> vector<8x256xf32>
    %c5_68 = arith.constant 5 : index
    %c0_69 = arith.constant 0 : index
    %c0_70 = arith.constant 0 : index
    %76 = vector.load %arg5[%c5_68, %c0_69, %c0_70] : memref<9x8x256xf32, #tpu.memory_space<vmem>>, vector<1x8x256xf32>
    %77 = vector.shape_cast %76 : vector<1x8x256xf32> to vector<8x256xf32>
    %78 = arith.mulf %75, %77 : vector<8x256xf32>
    %c40_71 = arith.constant 40 : index
    %c0_72 = arith.constant 0 : index
    %79 = vector.load %arg7[%c40_71, %c0_72] : memref<80x256xf32, #tpu.memory_space<vmem>>, vector<8x256xf32>
    tpu.vector_store %arg7[%c40_71, %c0_72], %78 {strides = array<i32>} : memref<80x256xf32, #tpu.memory_space<vmem>>, vector<8x256xf32>,
    %c241_i32_73 = arith.constant 241 : i32
    %80 = tpu.dynamic_rotate %53 by %c241_i32_73 dim 1 : vector<8x256xf32>, i32 -> vector<8x256xf32>
    %c6_74 = arith.constant 6 : index
    %c0_75 = arith.constant 0 : index
    %c0_76 = arith.constant 0 : index
    %81 = vector.load %arg5[%c6_74, %c0_75, %c0_76] : memref<9x8x256xf32, #tpu.memory_space<vmem>>, vector<1x8x256xf32>
    %82 = vector.shape_cast %81 : vector<1x8x256xf32> to vector<8x256xf32>
    %83 = arith.mulf %80, %82 : vector<8x256xf32>
    %c48_77 = arith.constant 48 : index
    %c0_78 = arith.constant 0 : index
    %84 = vector.load %arg7[%c48_77, %c0_78] : memref<80x256xf32, #tpu.memory_space<vmem>>, vector<8x256xf32>
    tpu.vector_store %arg7[%c48_77, %c0_78], %83 {strides = array<i32>} : memref<80x256xf32, #tpu.memory_space<vmem>>, vector<8x256xf32>,
    %c240_i32_79 = arith.constant 240 : i32
    %85 = tpu.dynamic_rotate %53 by %c240_i32_79 dim 1 : vector<8x256xf32>, i32 -> vector<8x256xf32>
    %c7_80 = arith.constant 7 : index
    %c0_81 = arith.constant 0 : index
    %c0_82 = arith.constant 0 : index
    %86 = vector.load %arg5[%c7_80, %c0_81, %c0_82] : memref<9x8x256xf32, #tpu.memory_space<vmem>>, vector<1x8x256xf32>
    %87 = vector.shape_cast %86 : vector<1x8x256xf32> to vector<8x256xf32>
    %88 = arith.mulf %85, %87 : vector<8x256xf32>
    %c56_83 = arith.constant 56 : index
    %c0_84 = arith.constant 0 : index
    %89 = vector.load %arg7[%c56_83, %c0_84] : memref<80x256xf32, #tpu.memory_space<vmem>>, vector<8x256xf32>
    tpu.vector_store %arg7[%c56_83, %c0_84], %88 {strides = array<i32>} : memref<80x256xf32, #tpu.memory_space<vmem>>, vector<8x256xf32>,
    %c239_i32_85 = arith.constant 239 : i32
    %90 = tpu.dynamic_rotate %53 by %c239_i32_85 dim 1 : vector<8x256xf32>, i32 -> vector<8x256xf32>
    %c8_86 = arith.constant 8 : index
    %c0_87 = arith.constant 0 : index
    %c0_88 = arith.constant 0 : index
    %91 = vector.load %arg5[%c8_86, %c0_87, %c0_88] : memref<9x8x256xf32, #tpu.memory_space<vmem>>, vector<1x8x256xf32>
    %92 = vector.shape_cast %91 : vector<1x8x256xf32> to vector<8x256xf32>
    %93 = arith.mulf %90, %92 : vector<8x256xf32>
    %c64_89 = arith.constant 64 : index
    %c0_90 = arith.constant 0 : index
    %94 = vector.load %arg7[%c64_89, %c0_90] : memref<80x256xf32, #tpu.memory_space<vmem>>, vector<8x256xf32>
    tpu.vector_store %arg7[%c64_89, %c0_90], %93 {strides = array<i32>} : memref<80x256xf32, #tpu.memory_space<vmem>>, vector<8x256xf32>,
    %95 = vector.extract_strided_slice %9 {offsets = [8, 0], sizes = [16, 80], strides = [1, 1]} : vector<32x80xf32> to vector<16x80xf32>
    %c0_91 = arith.constant 0 : index
    %c0_92 = arith.constant 0 : index
    %96 = vector.load %arg7[%c0_91, %c0_92] : memref<80x256xf32, #tpu.memory_space<vmem>>, vector<80x256xf32>
    %cst_93 = arith.constant dense<0.000000e+00> : vector<16x256xf32>
    %97 = tpu.matmul %95, %96, %cst_93 {dimension_numbers = #tpu.dot_dimension_numbers<[1], [0], [0], [1], [0, 0, 1, 1], [], []>} : vector<16x80xf32>, vector<80x256xf32>, vector<16x256xf32> -> vector<16x256xf32>
    %98 = vector.extract_strided_slice %97 {offsets = [0, 0], sizes = [8, 256], strides = [1, 1]} : vector<16x256xf32> to vector<8x256xf32>
    %cst_94 = arith.constant 0.000000e+00 : f32
    %99 = vector.broadcast %cst_94 : f32 to vector<8x256xf32>
    %100 = arith.maximumf %98, %99 : vector<8x256xf32>
    %101 = vector.extract_strided_slice %97 {offsets = [8, 0], sizes = [8, 256], strides = [1, 1]} : vector<16x256xf32> to vector<8x256xf32>
    %c17_i32_95 = arith.constant 17 : i32
    %102 = tpu.dynamic_rotate %100 by %c17_i32_95 dim 1 : vector<8x256xf32>, i32 -> vector<8x256xf32>
    %c0_96 = arith.constant 0 : index
    %c0_97 = arith.constant 0 : index
    %c0_98 = arith.constant 0 : index
    %103 = vector.load %arg5[%c0_96, %c0_97, %c0_98] : memref<9x8x256xf32, #tpu.memory_space<vmem>>, vector<1x8x256xf32>
    %104 = vector.shape_cast %103 : vector<1x8x256xf32> to vector<8x256xf32>
    %105 = arith.mulf %102, %104 : vector<8x256xf32>
    %c0_99 = arith.constant 0 : index
    %c0_100 = arith.constant 0 : index
    %106 = vector.load %arg7[%c0_99, %c0_100] : memref<80x256xf32, #tpu.memory_space<vmem>>, vector<8x256xf32>
    tpu.vector_store %arg7[%c0_99, %c0_100], %105 {strides = array<i32>} : memref<80x256xf32, #tpu.memory_space<vmem>>, vector<8x256xf32>,
    %c16_i32_101 = arith.constant 16 : i32
    %107 = tpu.dynamic_rotate %100 by %c16_i32_101 dim 1 : vector<8x256xf32>, i32 -> vector<8x256xf32>
    %c1_102 = arith.constant 1 : index
    %c0_103 = arith.constant 0 : index
    %c0_104 = arith.constant 0 : index
    %108 = vector.load %arg5[%c1_102, %c0_103, %c0_104] : memref<9x8x256xf32, #tpu.memory_space<vmem>>, vector<1x8x256xf32>
    %109 = vector.shape_cast %108 : vector<1x8x256xf32> to vector<8x256xf32>
    %110 = arith.mulf %107, %109 : vector<8x256xf32>
    %c8_105 = arith.constant 8 : index
    %c0_106 = arith.constant 0 : index
    %111 = vector.load %arg7[%c8_105, %c0_106] : memref<80x256xf32, #tpu.memory_space<vmem>>, vector<8x256xf32>
    tpu.vector_store %arg7[%c8_105, %c0_106], %110 {strides = array<i32>} : memref<80x256xf32, #tpu.memory_space<vmem>>, vector<8x256xf32>,
    %c15_i32_107 = arith.constant 15 : i32
    %112 = tpu.dynamic_rotate %100 by %c15_i32_107 dim 1 : vector<8x256xf32>, i32 -> vector<8x256xf32>
    %c2_108 = arith.constant 2 : index
    %c0_109 = arith.constant 0 : index
    %c0_110 = arith.constant 0 : index
    %113 = vector.load %arg5[%c2_108, %c0_109, %c0_110] : memref<9x8x256xf32, #tpu.memory_space<vmem>>, vector<1x8x256xf32>
    %114 = vector.shape_cast %113 : vector<1x8x256xf32> to vector<8x256xf32>
    %115 = arith.mulf %112, %114 : vector<8x256xf32>
    %c16_111 = arith.constant 16 : index
    %c0_112 = arith.constant 0 : index
    %116 = vector.load %arg7[%c16_111, %c0_112] : memref<80x256xf32, #tpu.memory_space<vmem>>, vector<8x256xf32>
    tpu.vector_store %arg7[%c16_111, %c0_112], %115 {strides = array<i32>} : memref<80x256xf32, #tpu.memory_space<vmem>>, vector<8x256xf32>,
    %c1_i32_113 = arith.constant 1 : i32
    %117 = tpu.dynamic_rotate %100 by %c1_i32_113 dim 1 : vector<8x256xf32>, i32 -> vector<8x256xf32>
    %c3_114 = arith.constant 3 : index
    %c0_115 = arith.constant 0 : index
    %c0_116 = arith.constant 0 : index
    %118 = vector.load %arg5[%c3_114, %c0_115, %c0_116] : memref<9x8x256xf32, #tpu.memory_space<vmem>>, vector<1x8x256xf32>
    %119 = vector.shape_cast %118 : vector<1x8x256xf32> to vector<8x256xf32>
    %120 = arith.mulf %117, %119 : vector<8x256xf32>
    %c24_117 = arith.constant 24 : index
    %c0_118 = arith.constant 0 : index
    %121 = vector.load %arg7[%c24_117, %c0_118] : memref<80x256xf32, #tpu.memory_space<vmem>>, vector<8x256xf32>
    tpu.vector_store %arg7[%c24_117, %c0_118], %120 {strides = array<i32>} : memref<80x256xf32, #tpu.memory_space<vmem>>, vector<8x256xf32>,
    %c32_119 = arith.constant 32 : index
    %c0_120 = arith.constant 0 : index
    %122 = vector.load %arg7[%c32_119, %c0_120] : memref<80x256xf32, #tpu.memory_space<vmem>>, vector<8x256xf32>
    tpu.vector_store %arg7[%c32_119, %c0_120], %100 {strides = array<i32>} : memref<80x256xf32, #tpu.memory_space<vmem>>, vector<8x256xf32>,
    %c255_i32_121 = arith.constant 255 : i32
    %123 = tpu.dynamic_rotate %100 by %c255_i32_121 dim 1 : vector<8x256xf32>, i32 -> vector<8x256xf32>
    %c5_122 = arith.constant 5 : index
    %c0_123 = arith.constant 0 : index
    %c0_124 = arith.constant 0 : index
    %124 = vector.load %arg5[%c5_122, %c0_123, %c0_124] : memref<9x8x256xf32, #tpu.memory_space<vmem>>, vector<1x8x256xf32>
    %125 = vector.shape_cast %124 : vector<1x8x256xf32> to vector<8x256xf32>
    %126 = arith.mulf %123, %125 : vector<8x256xf32>
    %c40_125 = arith.constant 40 : index
    %c0_126 = arith.constant 0 : index
    %127 = vector.load %arg7[%c40_125, %c0_126] : memref<80x256xf32, #tpu.memory_space<vmem>>, vector<8x256xf32>
    tpu.vector_store %arg7[%c40_125, %c0_126], %126 {strides = array<i32>} : memref<80x256xf32, #tpu.memory_space<vmem>>, vector<8x256xf32>,
    %c241_i32_127 = arith.constant 241 : i32
    %128 = tpu.dynamic_rotate %100 by %c241_i32_127 dim 1 : vector<8x256xf32>, i32 -> vector<8x256xf32>
    %c6_128 = arith.constant 6 : index
    %c0_129 = arith.constant 0 : index
    %c0_130 = arith.constant 0 : index
    %129 = vector.load %arg5[%c6_128, %c0_129, %c0_130] : memref<9x8x256xf32, #tpu.memory_space<vmem>>, vector<1x8x256xf32>
    %130 = vector.shape_cast %129 : vector<1x8x256xf32> to vector<8x256xf32>
    %131 = arith.mulf %128, %130 : vector<8x256xf32>
    %c48_131 = arith.constant 48 : index
    %c0_132 = arith.constant 0 : index
    %132 = vector.load %arg7[%c48_131, %c0_132] : memref<80x256xf32, #tpu.memory_space<vmem>>, vector<8x256xf32>
    tpu.vector_store %arg7[%c48_131, %c0_132], %131 {strides = array<i32>} : memref<80x256xf32, #tpu.memory_space<vmem>>, vector<8x256xf32>,
    %c240_i32_133 = arith.constant 240 : i32
    %133 = tpu.dynamic_rotate %100 by %c240_i32_133 dim 1 : vector<8x256xf32>, i32 -> vector<8x256xf32>
    %c7_134 = arith.constant 7 : index
    %c0_135 = arith.constant 0 : index
    %c0_136 = arith.constant 0 : index
    %134 = vector.load %arg5[%c7_134, %c0_135, %c0_136] : memref<9x8x256xf32, #tpu.memory_space<vmem>>, vector<1x8x256xf32>
    %135 = vector.shape_cast %134 : vector<1x8x256xf32> to vector<8x256xf32>
    %136 = arith.mulf %133, %135 : vector<8x256xf32>
    %c56_137 = arith.constant 56 : index
    %c0_138 = arith.constant 0 : index
    %137 = vector.load %arg7[%c56_137, %c0_138] : memref<80x256xf32, #tpu.memory_space<vmem>>, vector<8x256xf32>
    tpu.vector_store %arg7[%c56_137, %c0_138], %136 {strides = array<i32>} : memref<80x256xf32, #tpu.memory_space<vmem>>, vector<8x256xf32>,
    %c239_i32_139 = arith.constant 239 : i32
    %138 = tpu.dynamic_rotate %100 by %c239_i32_139 dim 1 : vector<8x256xf32>, i32 -> vector<8x256xf32>
    %c8_140 = arith.constant 8 : index
    %c0_141 = arith.constant 0 : index
    %c0_142 = arith.constant 0 : index
    %139 = vector.load %arg5[%c8_140, %c0_141, %c0_142] : memref<9x8x256xf32, #tpu.memory_space<vmem>>, vector<1x8x256xf32>
    %140 = vector.shape_cast %139 : vector<1x8x256xf32> to vector<8x256xf32>
    %141 = arith.mulf %138, %140 : vector<8x256xf32>
    %c64_143 = arith.constant 64 : index
    %c0_144 = arith.constant 0 : index
    %142 = vector.load %arg7[%c64_143, %c0_144] : memref<80x256xf32, #tpu.memory_space<vmem>>, vector<8x256xf32>
    tpu.vector_store %arg7[%c64_143, %c0_144], %141 {strides = array<i32>} : memref<80x256xf32, #tpu.memory_space<vmem>>, vector<8x256xf32>,
    %143 = vector.extract_strided_slice %9 {offsets = [24, 0], sizes = [8, 80], strides = [1, 1]} : vector<32x80xf32> to vector<8x80xf32>
    %c0_145 = arith.constant 0 : index
    %c0_146 = arith.constant 0 : index
    %144 = vector.load %arg7[%c0_145, %c0_146] : memref<80x256xf32, #tpu.memory_space<vmem>>, vector<80x256xf32>
    %cst_147 = arith.constant dense<0.000000e+00> : vector<8x256xf32>
    %145 = tpu.matmul %143, %144, %cst_147 {dimension_numbers = #tpu.dot_dimension_numbers<[1], [0], [0], [1], [0, 0, 1, 1], [], []>} : vector<8x80xf32>, vector<80x256xf32>, vector<8x256xf32> -> vector<8x256xf32>
    %146 = arith.addf %145, %101 : vector<8x256xf32>
    %c1_148 = arith.constant 1 : index
    %c0_149 = arith.constant 0 : index
    %c0_150 = arith.constant 0 : index
    %147 = vector.load %arg4[%c1_148, %c0_149, %c0_150] : memref<2x32x80xf32, #tpu.memory_space<vmem>>, vector<1x32x80xf32>
    %148 = vector.shape_cast %147 : vector<1x32x80xf32> to vector<32x80xf32>
    %c17_i32_151 = arith.constant 17 : i32
    %149 = tpu.dynamic_rotate %146 by %c17_i32_151 dim 1 : vector<8x256xf32>, i32 -> vector<8x256xf32>
    %c0_152 = arith.constant 0 : index
    %c0_153 = arith.constant 0 : index
    %c0_154 = arith.constant 0 : index
    %150 = vector.load %arg5[%c0_152, %c0_153, %c0_154] : memref<9x8x256xf32, #tpu.memory_space<vmem>>, vector<1x8x256xf32>
    %151 = vector.shape_cast %150 : vector<1x8x256xf32> to vector<8x256xf32>
    %152 = arith.mulf %149, %151 : vector<8x256xf32>
    %c0_155 = arith.constant 0 : index
    %c0_156 = arith.constant 0 : index
    %153 = vector.load %arg7[%c0_155, %c0_156] : memref<80x256xf32, #tpu.memory_space<vmem>>, vector<8x256xf32>
    tpu.vector_store %arg7[%c0_155, %c0_156], %152 {strides = array<i32>} : memref<80x256xf32, #tpu.memory_space<vmem>>, vector<8x256xf32>,
    %c16_i32_157 = arith.constant 16 : i32
    %154 = tpu.dynamic_rotate %146 by %c16_i32_157 dim 1 : vector<8x256xf32>, i32 -> vector<8x256xf32>
    %c1_158 = arith.constant 1 : index
    %c0_159 = arith.constant 0 : index
    %c0_160 = arith.constant 0 : index
    %155 = vector.load %arg5[%c1_158, %c0_159, %c0_160] : memref<9x8x256xf32, #tpu.memory_space<vmem>>, vector<1x8x256xf32>
    %156 = vector.shape_cast %155 : vector<1x8x256xf32> to vector<8x256xf32>
    %157 = arith.mulf %154, %156 : vector<8x256xf32>
    %c8_161 = arith.constant 8 : index
    %c0_162 = arith.constant 0 : index
    %158 = vector.load %arg7[%c8_161, %c0_162] : memref<80x256xf32, #tpu.memory_space<vmem>>, vector<8x256xf32>
    tpu.vector_store %arg7[%c8_161, %c0_162], %157 {strides = array<i32>} : memref<80x256xf32, #tpu.memory_space<vmem>>, vector<8x256xf32>,
    %c15_i32_163 = arith.constant 15 : i32
    %159 = tpu.dynamic_rotate %146 by %c15_i32_163 dim 1 : vector<8x256xf32>, i32 -> vector<8x256xf32>
    %c2_164 = arith.constant 2 : index
    %c0_165 = arith.constant 0 : index
    %c0_166 = arith.constant 0 : index
    %160 = vector.load %arg5[%c2_164, %c0_165, %c0_166] : memref<9x8x256xf32, #tpu.memory_space<vmem>>, vector<1x8x256xf32>
    %161 = vector.shape_cast %160 : vector<1x8x256xf32> to vector<8x256xf32>
    %162 = arith.mulf %159, %161 : vector<8x256xf32>
    %c16_167 = arith.constant 16 : index
    %c0_168 = arith.constant 0 : index
    %163 = vector.load %arg7[%c16_167, %c0_168] : memref<80x256xf32, #tpu.memory_space<vmem>>, vector<8x256xf32>
    tpu.vector_store %arg7[%c16_167, %c0_168], %162 {strides = array<i32>} : memref<80x256xf32, #tpu.memory_space<vmem>>, vector<8x256xf32>,
    %c1_i32_169 = arith.constant 1 : i32
    %164 = tpu.dynamic_rotate %146 by %c1_i32_169 dim 1 : vector<8x256xf32>, i32 -> vector<8x256xf32>
    %c3_170 = arith.constant 3 : index
    %c0_171 = arith.constant 0 : index
    %c0_172 = arith.constant 0 : index
    %165 = vector.load %arg5[%c3_170, %c0_171, %c0_172] : memref<9x8x256xf32, #tpu.memory_space<vmem>>, vector<1x8x256xf32>
    %166 = vector.shape_cast %165 : vector<1x8x256xf32> to vector<8x256xf32>
    %167 = arith.mulf %164, %166 : vector<8x256xf32>
    %c24_173 = arith.constant 24 : index
    %c0_174 = arith.constant 0 : index
    %168 = vector.load %arg7[%c24_173, %c0_174] : memref<80x256xf32, #tpu.memory_space<vmem>>, vector<8x256xf32>
    tpu.vector_store %arg7[%c24_173, %c0_174], %167 {strides = array<i32>} : memref<80x256xf32, #tpu.memory_space<vmem>>, vector<8x256xf32>,
    %c32_175 = arith.constant 32 : index
    %c0_176 = arith.constant 0 : index
    %169 = vector.load %arg7[%c32_175, %c0_176] : memref<80x256xf32, #tpu.memory_space<vmem>>, vector<8x256xf32>
    tpu.vector_store %arg7[%c32_175, %c0_176], %146 {strides = array<i32>} : memref<80x256xf32, #tpu.memory_space<vmem>>, vector<8x256xf32>,
    %c255_i32_177 = arith.constant 255 : i32
    %170 = tpu.dynamic_rotate %146 by %c255_i32_177 dim 1 : vector<8x256xf32>, i32 -> vector<8x256xf32>
    %c5_178 = arith.constant 5 : index
    %c0_179 = arith.constant 0 : index
    %c0_180 = arith.constant 0 : index
    %171 = vector.load %arg5[%c5_178, %c0_179, %c0_180] : memref<9x8x256xf32, #tpu.memory_space<vmem>>, vector<1x8x256xf32>
    %172 = vector.shape_cast %171 : vector<1x8x256xf32> to vector<8x256xf32>
    %173 = arith.mulf %170, %172 : vector<8x256xf32>
    %c40_181 = arith.constant 40 : index
    %c0_182 = arith.constant 0 : index
    %174 = vector.load %arg7[%c40_181, %c0_182] : memref<80x256xf32, #tpu.memory_space<vmem>>, vector<8x256xf32>
    tpu.vector_store %arg7[%c40_181, %c0_182], %173 {strides = array<i32>} : memref<80x256xf32, #tpu.memory_space<vmem>>, vector<8x256xf32>,
    %c241_i32_183 = arith.constant 241 : i32
    %175 = tpu.dynamic_rotate %146 by %c241_i32_183 dim 1 : vector<8x256xf32>, i32 -> vector<8x256xf32>
    %c6_184 = arith.constant 6 : index
    %c0_185 = arith.constant 0 : index
    %c0_186 = arith.constant 0 : index
    %176 = vector.load %arg5[%c6_184, %c0_185, %c0_186] : memref<9x8x256xf32, #tpu.memory_space<vmem>>, vector<1x8x256xf32>
    %177 = vector.shape_cast %176 : vector<1x8x256xf32> to vector<8x256xf32>
    %178 = arith.mulf %175, %177 : vector<8x256xf32>
    %c48_187 = arith.constant 48 : index
    %c0_188 = arith.constant 0 : index
    %179 = vector.load %arg7[%c48_187, %c0_188] : memref<80x256xf32, #tpu.memory_space<vmem>>, vector<8x256xf32>
    tpu.vector_store %arg7[%c48_187, %c0_188], %178 {strides = array<i32>} : memref<80x256xf32, #tpu.memory_space<vmem>>, vector<8x256xf32>,
    %c240_i32_189 = arith.constant 240 : i32
    %180 = tpu.dynamic_rotate %146 by %c240_i32_189 dim 1 : vector<8x256xf32>, i32 -> vector<8x256xf32>
    %c7_190 = arith.constant 7 : index
    %c0_191 = arith.constant 0 : index
    %c0_192 = arith.constant 0 : index
    %181 = vector.load %arg5[%c7_190, %c0_191, %c0_192] : memref<9x8x256xf32, #tpu.memory_space<vmem>>, vector<1x8x256xf32>
    %182 = vector.shape_cast %181 : vector<1x8x256xf32> to vector<8x256xf32>
    %183 = arith.mulf %180, %182 : vector<8x256xf32>
    %c56_193 = arith.constant 56 : index
    %c0_194 = arith.constant 0 : index
    %184 = vector.load %arg7[%c56_193, %c0_194] : memref<80x256xf32, #tpu.memory_space<vmem>>, vector<8x256xf32>
    tpu.vector_store %arg7[%c56_193, %c0_194], %183 {strides = array<i32>} : memref<80x256xf32, #tpu.memory_space<vmem>>, vector<8x256xf32>,
    %c239_i32_195 = arith.constant 239 : i32
    %185 = tpu.dynamic_rotate %146 by %c239_i32_195 dim 1 : vector<8x256xf32>, i32 -> vector<8x256xf32>
    %c8_196 = arith.constant 8 : index
    %c0_197 = arith.constant 0 : index
    %c0_198 = arith.constant 0 : index
    %186 = vector.load %arg5[%c8_196, %c0_197, %c0_198] : memref<9x8x256xf32, #tpu.memory_space<vmem>>, vector<1x8x256xf32>
    %187 = vector.shape_cast %186 : vector<1x8x256xf32> to vector<8x256xf32>
    %188 = arith.mulf %185, %187 : vector<8x256xf32>
    %c64_199 = arith.constant 64 : index
    %c0_200 = arith.constant 0 : index
    %189 = vector.load %arg7[%c64_199, %c0_200] : memref<80x256xf32, #tpu.memory_space<vmem>>, vector<8x256xf32>
    tpu.vector_store %arg7[%c64_199, %c0_200], %188 {strides = array<i32>} : memref<80x256xf32, #tpu.memory_space<vmem>>, vector<8x256xf32>,
    %190 = vector.extract_strided_slice %148 {offsets = [0, 0], sizes = [8, 80], strides = [1, 1]} : vector<32x80xf32> to vector<8x80xf32>
    %c0_201 = arith.constant 0 : index
    %c0_202 = arith.constant 0 : index
    %191 = vector.load %arg7[%c0_201, %c0_202] : memref<80x256xf32, #tpu.memory_space<vmem>>, vector<80x256xf32>
    %cst_203 = arith.constant dense<0.000000e+00> : vector<8x256xf32>
    %192 = tpu.matmul %190, %191, %cst_203 {dimension_numbers = #tpu.dot_dimension_numbers<[1], [0], [0], [1], [0, 0, 1, 1], [], []>} : vector<8x80xf32>, vector<80x256xf32>, vector<8x256xf32> -> vector<8x256xf32>
    %c17_i32_204 = arith.constant 17 : i32
    %193 = tpu.dynamic_rotate %192 by %c17_i32_204 dim 1 : vector<8x256xf32>, i32 -> vector<8x256xf32>
    %c0_205 = arith.constant 0 : index
    %c0_206 = arith.constant 0 : index
    %c0_207 = arith.constant 0 : index
    %194 = vector.load %arg5[%c0_205, %c0_206, %c0_207] : memref<9x8x256xf32, #tpu.memory_space<vmem>>, vector<1x8x256xf32>
    %195 = vector.shape_cast %194 : vector<1x8x256xf32> to vector<8x256xf32>
    %196 = arith.mulf %193, %195 : vector<8x256xf32>
    %c0_208 = arith.constant 0 : index
    %c0_209 = arith.constant 0 : index
    %197 = vector.load %arg7[%c0_208, %c0_209] : memref<80x256xf32, #tpu.memory_space<vmem>>, vector<8x256xf32>
    tpu.vector_store %arg7[%c0_208, %c0_209], %196 {strides = array<i32>} : memref<80x256xf32, #tpu.memory_space<vmem>>, vector<8x256xf32>,
    %c16_i32_210 = arith.constant 16 : i32
    %198 = tpu.dynamic_rotate %192 by %c16_i32_210 dim 1 : vector<8x256xf32>, i32 -> vector<8x256xf32>
    %c1_211 = arith.constant 1 : index
    %c0_212 = arith.constant 0 : index
    %c0_213 = arith.constant 0 : index
    %199 = vector.load %arg5[%c1_211, %c0_212, %c0_213] : memref<9x8x256xf32, #tpu.memory_space<vmem>>, vector<1x8x256xf32>
    %200 = vector.shape_cast %199 : vector<1x8x256xf32> to vector<8x256xf32>
    %201 = arith.mulf %198, %200 : vector<8x256xf32>
    %c8_214 = arith.constant 8 : index
    %c0_215 = arith.constant 0 : index
    %202 = vector.load %arg7[%c8_214, %c0_215] : memref<80x256xf32, #tpu.memory_space<vmem>>, vector<8x256xf32>
    tpu.vector_store %arg7[%c8_214, %c0_215], %201 {strides = array<i32>} : memref<80x256xf32, #tpu.memory_space<vmem>>, vector<8x256xf32>,
    %c15_i32_216 = arith.constant 15 : i32
    %203 = tpu.dynamic_rotate %192 by %c15_i32_216 dim 1 : vector<8x256xf32>, i32 -> vector<8x256xf32>
    %c2_217 = arith.constant 2 : index
    %c0_218 = arith.constant 0 : index
    %c0_219 = arith.constant 0 : index
    %204 = vector.load %arg5[%c2_217, %c0_218, %c0_219] : memref<9x8x256xf32, #tpu.memory_space<vmem>>, vector<1x8x256xf32>
    %205 = vector.shape_cast %204 : vector<1x8x256xf32> to vector<8x256xf32>
    %206 = arith.mulf %203, %205 : vector<8x256xf32>
    %c16_220 = arith.constant 16 : index
    %c0_221 = arith.constant 0 : index
    %207 = vector.load %arg7[%c16_220, %c0_221] : memref<80x256xf32, #tpu.memory_space<vmem>>, vector<8x256xf32>
    tpu.vector_store %arg7[%c16_220, %c0_221], %206 {strides = array<i32>} : memref<80x256xf32, #tpu.memory_space<vmem>>, vector<8x256xf32>,
    %c1_i32_222 = arith.constant 1 : i32
    %208 = tpu.dynamic_rotate %192 by %c1_i32_222 dim 1 : vector<8x256xf32>, i32 -> vector<8x256xf32>
    %c3_223 = arith.constant 3 : index
    %c0_224 = arith.constant 0 : index
    %c0_225 = arith.constant 0 : index
    %209 = vector.load %arg5[%c3_223, %c0_224, %c0_225] : memref<9x8x256xf32, #tpu.memory_space<vmem>>, vector<1x8x256xf32>
    %210 = vector.shape_cast %209 : vector<1x8x256xf32> to vector<8x256xf32>
    %211 = arith.mulf %208, %210 : vector<8x256xf32>
    %c24_226 = arith.constant 24 : index
    %c0_227 = arith.constant 0 : index
    %212 = vector.load %arg7[%c24_226, %c0_227] : memref<80x256xf32, #tpu.memory_space<vmem>>, vector<8x256xf32>
    tpu.vector_store %arg7[%c24_226, %c0_227], %211 {strides = array<i32>} : memref<80x256xf32, #tpu.memory_space<vmem>>, vector<8x256xf32>,
    %c32_228 = arith.constant 32 : index
    %c0_229 = arith.constant 0 : index
    %213 = vector.load %arg7[%c32_228, %c0_229] : memref<80x256xf32, #tpu.memory_space<vmem>>, vector<8x256xf32>
    tpu.vector_store %arg7[%c32_228, %c0_229], %192 {strides = array<i32>} : memref<80x256xf32, #tpu.memory_space<vmem>>, vector<8x256xf32>,
    %c255_i32_230 = arith.constant 255 : i32
    %214 = tpu.dynamic_rotate %192 by %c255_i32_230 dim 1 : vector<8x256xf32>, i32 -> vector<8x256xf32>
    %c5_231 = arith.constant 5 : index
    %c0_232 = arith.constant 0 : index
    %c0_233 = arith.constant 0 : index
    %215 = vector.load %arg5[%c5_231, %c0_232, %c0_233] : memref<9x8x256xf32, #tpu.memory_space<vmem>>, vector<1x8x256xf32>
    %216 = vector.shape_cast %215 : vector<1x8x256xf32> to vector<8x256xf32>
    %217 = arith.mulf %214, %216 : vector<8x256xf32>
    %c40_234 = arith.constant 40 : index
    %c0_235 = arith.constant 0 : index
    %218 = vector.load %arg7[%c40_234, %c0_235] : memref<80x256xf32, #tpu.memory_space<vmem>>, vector<8x256xf32>
    tpu.vector_store %arg7[%c40_234, %c0_235], %217 {strides = array<i32>} : memref<80x256xf32, #tpu.memory_space<vmem>>, vector<8x256xf32>,
    %c241_i32_236 = arith.constant 241 : i32
    %219 = tpu.dynamic_rotate %192 by %c241_i32_236 dim 1 : vector<8x256xf32>, i32 -> vector<8x256xf32>
    %c6_237 = arith.constant 6 : index
    %c0_238 = arith.constant 0 : index
    %c0_239 = arith.constant 0 : index
    %220 = vector.load %arg5[%c6_237, %c0_238, %c0_239] : memref<9x8x256xf32, #tpu.memory_space<vmem>>, vector<1x8x256xf32>
    %221 = vector.shape_cast %220 : vector<1x8x256xf32> to vector<8x256xf32>
    %222 = arith.mulf %219, %221 : vector<8x256xf32>
    %c48_240 = arith.constant 48 : index
    %c0_241 = arith.constant 0 : index
    %223 = vector.load %arg7[%c48_240, %c0_241] : memref<80x256xf32, #tpu.memory_space<vmem>>, vector<8x256xf32>
    tpu.vector_store %arg7[%c48_240, %c0_241], %222 {strides = array<i32>} : memref<80x256xf32, #tpu.memory_space<vmem>>, vector<8x256xf32>,
    %c240_i32_242 = arith.constant 240 : i32
    %224 = tpu.dynamic_rotate %192 by %c240_i32_242 dim 1 : vector<8x256xf32>, i32 -> vector<8x256xf32>
    %c7_243 = arith.constant 7 : index
    %c0_244 = arith.constant 0 : index
    %c0_245 = arith.constant 0 : index
    %225 = vector.load %arg5[%c7_243, %c0_244, %c0_245] : memref<9x8x256xf32, #tpu.memory_space<vmem>>, vector<1x8x256xf32>
    %226 = vector.shape_cast %225 : vector<1x8x256xf32> to vector<8x256xf32>
    %227 = arith.mulf %224, %226 : vector<8x256xf32>
    %c56_246 = arith.constant 56 : index
    %c0_247 = arith.constant 0 : index
    %228 = vector.load %arg7[%c56_246, %c0_247] : memref<80x256xf32, #tpu.memory_space<vmem>>, vector<8x256xf32>
    tpu.vector_store %arg7[%c56_246, %c0_247], %227 {strides = array<i32>} : memref<80x256xf32, #tpu.memory_space<vmem>>, vector<8x256xf32>,
    %c239_i32_248 = arith.constant 239 : i32
    %229 = tpu.dynamic_rotate %192 by %c239_i32_248 dim 1 : vector<8x256xf32>, i32 -> vector<8x256xf32>
    %c8_249 = arith.constant 8 : index
    %c0_250 = arith.constant 0 : index
    %c0_251 = arith.constant 0 : index
    %230 = vector.load %arg5[%c8_249, %c0_250, %c0_251] : memref<9x8x256xf32, #tpu.memory_space<vmem>>, vector<1x8x256xf32>
    %231 = vector.shape_cast %230 : vector<1x8x256xf32> to vector<8x256xf32>
    %232 = arith.mulf %229, %231 : vector<8x256xf32>
    %c64_252 = arith.constant 64 : index
    %c0_253 = arith.constant 0 : index
    %233 = vector.load %arg7[%c64_252, %c0_253] : memref<80x256xf32, #tpu.memory_space<vmem>>, vector<8x256xf32>
    tpu.vector_store %arg7[%c64_252, %c0_253], %232 {strides = array<i32>} : memref<80x256xf32, #tpu.memory_space<vmem>>, vector<8x256xf32>,
    %234 = vector.extract_strided_slice %148 {offsets = [8, 0], sizes = [16, 80], strides = [1, 1]} : vector<32x80xf32> to vector<16x80xf32>
    %c0_254 = arith.constant 0 : index
    %c0_255 = arith.constant 0 : index
    %235 = vector.load %arg7[%c0_254, %c0_255] : memref<80x256xf32, #tpu.memory_space<vmem>>, vector<80x256xf32>
    %cst_256 = arith.constant dense<0.000000e+00> : vector<16x256xf32>
    %236 = tpu.matmul %234, %235, %cst_256 {dimension_numbers = #tpu.dot_dimension_numbers<[1], [0], [0], [1], [0, 0, 1, 1], [], []>} : vector<16x80xf32>, vector<80x256xf32>, vector<16x256xf32> -> vector<16x256xf32>
    %237 = vector.extract_strided_slice %236 {offsets = [0, 0], sizes = [8, 256], strides = [1, 1]} : vector<16x256xf32> to vector<8x256xf32>
    %cst_257 = arith.constant 0.000000e+00 : f32
    %238 = vector.broadcast %cst_257 : f32 to vector<8x256xf32>
    %239 = arith.maximumf %237, %238 : vector<8x256xf32>
    %240 = vector.extract_strided_slice %236 {offsets = [8, 0], sizes = [8, 256], strides = [1, 1]} : vector<16x256xf32> to vector<8x256xf32>
    %c17_i32_258 = arith.constant 17 : i32
    %241 = tpu.dynamic_rotate %239 by %c17_i32_258 dim 1 : vector<8x256xf32>, i32 -> vector<8x256xf32>
    %c0_259 = arith.constant 0 : index
    %c0_260 = arith.constant 0 : index
    %c0_261 = arith.constant 0 : index
    %242 = vector.load %arg5[%c0_259, %c0_260, %c0_261] : memref<9x8x256xf32, #tpu.memory_space<vmem>>, vector<1x8x256xf32>
    %243 = vector.shape_cast %242 : vector<1x8x256xf32> to vector<8x256xf32>
    %244 = arith.mulf %241, %243 : vector<8x256xf32>
    %c0_262 = arith.constant 0 : index
    %c0_263 = arith.constant 0 : index
    %245 = vector.load %arg7[%c0_262, %c0_263] : memref<80x256xf32, #tpu.memory_space<vmem>>, vector<8x256xf32>
    tpu.vector_store %arg7[%c0_262, %c0_263], %244 {strides = array<i32>} : memref<80x256xf32, #tpu.memory_space<vmem>>, vector<8x256xf32>,
    %c16_i32_264 = arith.constant 16 : i32
    %246 = tpu.dynamic_rotate %239 by %c16_i32_264 dim 1 : vector<8x256xf32>, i32 -> vector<8x256xf32>
    %c1_265 = arith.constant 1 : index
    %c0_266 = arith.constant 0 : index
    %c0_267 = arith.constant 0 : index
    %247 = vector.load %arg5[%c1_265, %c0_266, %c0_267] : memref<9x8x256xf32, #tpu.memory_space<vmem>>, vector<1x8x256xf32>
    %248 = vector.shape_cast %247 : vector<1x8x256xf32> to vector<8x256xf32>
    %249 = arith.mulf %246, %248 : vector<8x256xf32>
    %c8_268 = arith.constant 8 : index
    %c0_269 = arith.constant 0 : index
    %250 = vector.load %arg7[%c8_268, %c0_269] : memref<80x256xf32, #tpu.memory_space<vmem>>, vector<8x256xf32>
    tpu.vector_store %arg7[%c8_268, %c0_269], %249 {strides = array<i32>} : memref<80x256xf32, #tpu.memory_space<vmem>>, vector<8x256xf32>,
    %c15_i32_270 = arith.constant 15 : i32
    %251 = tpu.dynamic_rotate %239 by %c15_i32_270 dim 1 : vector<8x256xf32>, i32 -> vector<8x256xf32>
    %c2_271 = arith.constant 2 : index
    %c0_272 = arith.constant 0 : index
    %c0_273 = arith.constant 0 : index
    %252 = vector.load %arg5[%c2_271, %c0_272, %c0_273] : memref<9x8x256xf32, #tpu.memory_space<vmem>>, vector<1x8x256xf32>
    %253 = vector.shape_cast %252 : vector<1x8x256xf32> to vector<8x256xf32>
    %254 = arith.mulf %251, %253 : vector<8x256xf32>
    %c16_274 = arith.constant 16 : index
    %c0_275 = arith.constant 0 : index
    %255 = vector.load %arg7[%c16_274, %c0_275] : memref<80x256xf32, #tpu.memory_space<vmem>>, vector<8x256xf32>
    tpu.vector_store %arg7[%c16_274, %c0_275], %254 {strides = array<i32>} : memref<80x256xf32, #tpu.memory_space<vmem>>, vector<8x256xf32>,
    %c1_i32_276 = arith.constant 1 : i32
    %256 = tpu.dynamic_rotate %239 by %c1_i32_276 dim 1 : vector<8x256xf32>, i32 -> vector<8x256xf32>
    %c3_277 = arith.constant 3 : index
    %c0_278 = arith.constant 0 : index
    %c0_279 = arith.constant 0 : index
    %257 = vector.load %arg5[%c3_277, %c0_278, %c0_279] : memref<9x8x256xf32, #tpu.memory_space<vmem>>, vector<1x8x256xf32>
    %258 = vector.shape_cast %257 : vector<1x8x256xf32> to vector<8x256xf32>
    %259 = arith.mulf %256, %258 : vector<8x256xf32>
    %c24_280 = arith.constant 24 : index
    %c0_281 = arith.constant 0 : index
    %260 = vector.load %arg7[%c24_280, %c0_281] : memref<80x256xf32, #tpu.memory_space<vmem>>, vector<8x256xf32>
    tpu.vector_store %arg7[%c24_280, %c0_281], %259 {strides = array<i32>} : memref<80x256xf32, #tpu.memory_space<vmem>>, vector<8x256xf32>,
    %c32_282 = arith.constant 32 : index
    %c0_283 = arith.constant 0 : index
    %261 = vector.load %arg7[%c32_282, %c0_283] : memref<80x256xf32, #tpu.memory_space<vmem>>, vector<8x256xf32>
    tpu.vector_store %arg7[%c32_282, %c0_283], %239 {strides = array<i32>} : memref<80x256xf32, #tpu.memory_space<vmem>>, vector<8x256xf32>,
    %c255_i32_284 = arith.constant 255 : i32
    %262 = tpu.dynamic_rotate %239 by %c255_i32_284 dim 1 : vector<8x256xf32>, i32 -> vector<8x256xf32>
    %c5_285 = arith.constant 5 : index
    %c0_286 = arith.constant 0 : index
    %c0_287 = arith.constant 0 : index
    %263 = vector.load %arg5[%c5_285, %c0_286, %c0_287] : memref<9x8x256xf32, #tpu.memory_space<vmem>>, vector<1x8x256xf32>
    %264 = vector.shape_cast %263 : vector<1x8x256xf32> to vector<8x256xf32>
    %265 = arith.mulf %262, %264 : vector<8x256xf32>
    %c40_288 = arith.constant 40 : index
    %c0_289 = arith.constant 0 : index
    %266 = vector.load %arg7[%c40_288, %c0_289] : memref<80x256xf32, #tpu.memory_space<vmem>>, vector<8x256xf32>
    tpu.vector_store %arg7[%c40_288, %c0_289], %265 {strides = array<i32>} : memref<80x256xf32, #tpu.memory_space<vmem>>, vector<8x256xf32>,
    %c241_i32_290 = arith.constant 241 : i32
    %267 = tpu.dynamic_rotate %239 by %c241_i32_290 dim 1 : vector<8x256xf32>, i32 -> vector<8x256xf32>
    %c6_291 = arith.constant 6 : index
    %c0_292 = arith.constant 0 : index
    %c0_293 = arith.constant 0 : index
    %268 = vector.load %arg5[%c6_291, %c0_292, %c0_293] : memref<9x8x256xf32, #tpu.memory_space<vmem>>, vector<1x8x256xf32>
    %269 = vector.shape_cast %268 : vector<1x8x256xf32> to vector<8x256xf32>
    %270 = arith.mulf %267, %269 : vector<8x256xf32>
    %c48_294 = arith.constant 48 : index
    %c0_295 = arith.constant 0 : index
    %271 = vector.load %arg7[%c48_294, %c0_295] : memref<80x256xf32, #tpu.memory_space<vmem>>, vector<8x256xf32>
    tpu.vector_store %arg7[%c48_294, %c0_295], %270 {strides = array<i32>} : memref<80x256xf32, #tpu.memory_space<vmem>>, vector<8x256xf32>,
    %c240_i32_296 = arith.constant 240 : i32
    %272 = tpu.dynamic_rotate %239 by %c240_i32_296 dim 1 : vector<8x256xf32>, i32 -> vector<8x256xf32>
    %c7_297 = arith.constant 7 : index
    %c0_298 = arith.constant 0 : index
    %c0_299 = arith.constant 0 : index
    %273 = vector.load %arg5[%c7_297, %c0_298, %c0_299] : memref<9x8x256xf32, #tpu.memory_space<vmem>>, vector<1x8x256xf32>
    %274 = vector.shape_cast %273 : vector<1x8x256xf32> to vector<8x256xf32>
    %275 = arith.mulf %272, %274 : vector<8x256xf32>
    %c56_300 = arith.constant 56 : index
    %c0_301 = arith.constant 0 : index
    %276 = vector.load %arg7[%c56_300, %c0_301] : memref<80x256xf32, #tpu.memory_space<vmem>>, vector<8x256xf32>
    tpu.vector_store %arg7[%c56_300, %c0_301], %275 {strides = array<i32>} : memref<80x256xf32, #tpu.memory_space<vmem>>, vector<8x256xf32>,
    %c239_i32_302 = arith.constant 239 : i32
    %277 = tpu.dynamic_rotate %239 by %c239_i32_302 dim 1 : vector<8x256xf32>, i32 -> vector<8x256xf32>
    %c8_303 = arith.constant 8 : index
    %c0_304 = arith.constant 0 : index
    %c0_305 = arith.constant 0 : index
    %278 = vector.load %arg5[%c8_303, %c0_304, %c0_305] : memref<9x8x256xf32, #tpu.memory_space<vmem>>, vector<1x8x256xf32>
    %279 = vector.shape_cast %278 : vector<1x8x256xf32> to vector<8x256xf32>
    %280 = arith.mulf %277, %279 : vector<8x256xf32>
    %c64_306 = arith.constant 64 : index
    %c0_307 = arith.constant 0 : index
    %281 = vector.load %arg7[%c64_306, %c0_307] : memref<80x256xf32, #tpu.memory_space<vmem>>, vector<8x256xf32>
    tpu.vector_store %arg7[%c64_306, %c0_307], %280 {strides = array<i32>} : memref<80x256xf32, #tpu.memory_space<vmem>>, vector<8x256xf32>,
    %282 = vector.extract_strided_slice %148 {offsets = [24, 0], sizes = [8, 80], strides = [1, 1]} : vector<32x80xf32> to vector<8x80xf32>
    %c0_308 = arith.constant 0 : index
    %c0_309 = arith.constant 0 : index
    %283 = vector.load %arg7[%c0_308, %c0_309] : memref<80x256xf32, #tpu.memory_space<vmem>>, vector<80x256xf32>
    %cst_310 = arith.constant dense<0.000000e+00> : vector<8x256xf32>
    %284 = tpu.matmul %282, %283, %cst_310 {dimension_numbers = #tpu.dot_dimension_numbers<[1], [0], [0], [1], [0, 0, 1, 1], [], []>} : vector<8x80xf32>, vector<80x256xf32>, vector<8x256xf32> -> vector<8x256xf32>
    %285 = arith.addf %284, %240 : vector<8x256xf32>
    %c0_311 = arith.constant 0 : index
    %c0_312 = arith.constant 0 : index
    %286 = vector.load %arg6[%c0_311, %c0_312] : memref<8x256xf32, #tpu.memory_space<vmem>>, vector<8x256xf32>
    tpu.vector_store %arg6[%c0_311, %c0_312], %285 {strides = array<i32>} : memref<8x256xf32, #tpu.memory_space<vmem>>, vector<8x256xf32>,
    return
  }
  func.func @transform_0(%arg0: i32) -> (i32, i32) {
    %c0_i32 = arith.constant 0 : i32
    %c0_i32_0 = arith.constant 0 : i32
    return %c0_i32, %arg0 : i32, i32
  }
  func.func @transform_1(%arg0: i32) -> (i32, i32) {
    %c0_i32 = arith.constant 0 : i32
    %c0_i32_0 = arith.constant 0 : i32
    %c0_i32_1 = arith.constant 0 : i32
    return %c0_i32, %c0_i32_0 : i32, i32
  }
  func.func @transform_2(%arg0: i32) -> (i32, i32) {
    %c0_i32 = arith.constant 0 : i32
    %c0_i32_0 = arith.constant 0 : i32
    %c0_i32_1 = arith.constant 0 : i32
    return %c0_i32, %c0_i32_0 : i32, i32
  }
  func.func @transform_3(%arg0: i32) -> (i32, i32, i32) {
    %c0_i32 = arith.constant 0 : i32
    %c0_i32_0 = arith.constant 0 : i32
    %c0_i32_1 = arith.constant 0 : i32
    %c0_i32_2 = arith.constant 0 : i32
    return %c0_i32, %c0_i32_0, %c0_i32_1 : i32, i32, i32
  }
  func.func @transform_4(%arg0: i32) -> (i32, i32, i32) {
    %c0_i32 = arith.constant 0 : i32
    %c0_i32_0 = arith.constant 0 : i32
    %c0_i32_1 = arith.constant 0 : i32
    %c0_i32_2 = arith.constant 0 : i32
    return %c0_i32, %c0_i32_0, %c0_i32_1 : i32, i32, i32
  }
  func.func @transform_5(%arg0: i32) -> (i32, i32) {
    %c0_i32 = arith.constant 0 : i32
    %c0_i32_0 = arith.constant 0 : i32
    return %c0_i32, %arg0 : i32, i32
  }
}

</mosaic_0001>

<llo_original>
// kernel: feature_extract_forward.1
$region0: #{feature_extract_forward.1}
  #allocation0 [shape = 'u32[]', space=smem, size = 0x4, offset = 0x4, fixed_abs, tag = 'smem constant byte address 0x4 - core index']
  #allocation1 [shape = 'u32[144,128]{1,0:T(1,128)}', space=vmem, size = 0x12000, scoped, tag = 'internal scratch']
  #allocation2 [shape = 'f32[80,256]{1,0:T(8,128)}', space=vmem, size = 0x14000, scoped, tag = 'scratch operand']
  %s0 = inlined_call_operand.vmem [shape: f32[4,512], index: 0, kind: input, shape index: {}]
  %s1 = inlined_call_operand.vmem [shape: f32[8,4], index: 1, kind: input, shape index: {}]
  %s2 = inlined_call_operand.vmem [shape: f32[8,1], index: 2, kind: input, shape index: {}]
  %s3 = inlined_call_operand.vmem [shape: f32[2,32,80], index: 3, kind: input, shape index: {}]
  %s4 = inlined_call_operand.vmem [shape: f32[9,8,256], index: 4, kind: input, shape index: {}]
  %s5 = inlined_call_operand.vmem [shape: f32[8,512], index: 5, kind: output, shape index: {}]
  %s6 = sld [smem:[#allocation0]]
  $region53: #{feature_extract_forward.1} parent=0
    _
  %s8 = ssub.s32 1, %s6
  %s9 = scalar_select 0, %s8, %s6
  loop: start=0, step=1, limit=4
  $region2: #{feature_extract_forward.1} parent=0 // loop_pre_header
    _
  $region3: #{feature_extract_forward.1} parent=0 // loop_header
    %s11 = sphi 0, %s15
    %p12 = scmp.ge.s32.totalorder %s11, 4
    %s21 = sphi 0, %s23
    %s24 = sphi 0, %s21
    %s25 = sphi 0, %s24
    %s41 = sphi 0, %s25
    %s45 = sphi 0, %s45
    %s47 = sphi 0, %s45
    %s48 = sphi 0, %s47
    %s62 = sphi 0, %s48
    %s66 = sphi 0, %s66
    %s68 = sphi 0, %s66
    %s69 = sphi 0, %s68
    %s83 = sphi 0, %s69
    %s87 = sphi 0, %s87
    %s89 = sphi 0, %s87
    %s90 = sphi 0, %s89
    %s104 = sphi 0, %s90
    %s108 = sphi 0, %s108
    %s110 = sphi 0, %s108
    %s111 = sphi 0, %s110
    %s125 = sphi 0, %s111
    %s131 = sphi 0, %s133
    %s134 = sphi 0, %s131
    %s135 = sphi 0, %s134
    %s151 = sphi 0, %s135
  $region4: #{feature_extract_forward.1} parent=0 // loop_header_branch
    %14 = sbr.rel (%p12) target = $region8
  $region5: #{feature_extract_forward.1} parent=0 // loop_body
    %s16 = ssub.s32 %s11, 1
    %s17 = ssub.s32 %s11, 2
    %s18 = sadd.s32 %s11, 1
    %s19 = ssub.s32 %s11, %s18
    %p20 = scmp.eq.s32.totalorder %s19, 0
    %s22 = sadd.s32 %s21, 1
    %s23 = scalar_select %p20, %s21, %s22
    %p26 = pneg %p20
    %p27 = scmp.eq.s32.totalorder %s11, 1
    %p28 = por %p26, %p27
    %p29 = scmp.ne.s32.totalorder %s21, %s24
    %p30 = scmp.eq.s32.totalorder %s11, 0
    %p31 = por %p29, %p30
    %p32 = scmp.ne.s32.totalorder %s21, %s24
    %p33 = scmp.eq.s32.totalorder %s16, 1
    %p34 = por %p32, %p33
    %p35 = scmp.ne.s32.totalorder %s24, %s25
    %p36 = scmp.eq.s32.totalorder %s16, 0
    %p37 = por %p35, %p36
    %p38 = scmp.ne.s32.totalorder %s24, %s25
    %p39 = scmp.eq.s32.totalorder %s17, 1
    %p40 = por %p38, %p39
    %p42 = scmp.ne.s32.totalorder %s25, %s41
    %p43 = scmp.eq.s32.totalorder %s17, 0
    %p44 = por %p42, %p43
    %s46 = sadd.s32 %s45, 1
    %p49 = scmp.eq.s32.totalorder %s11, 1
    %p50 = scmp.ne.s32.totalorder %s45, %s47
    %p51 = scmp.eq.s32.totalorder %s11, 0
    %p52 = por %p50, %p51
    %p53 = scmp.ne.s32.totalorder %s45, %s47
    %p54 = scmp.eq.s32.totalorder %s16, 1
    %p55 = por %p53, %p54
    %p56 = scmp.ne.s32.totalorder %s47, %s48
    %p57 = scmp.eq.s32.totalorder %s16, 0
    %p58 = por %p56, %p57
    %p59 = scmp.ne.s32.totalorder %s47, %s48
    %p60 = scmp.eq.s32.totalorder %s17, 1
    %p61 = por %p59, %p60
    %p63 = scmp.ne.s32.totalorder %s48, %s62
    %p64 = scmp.eq.s32.totalorder %s17, 0
    %p65 = por %p63, %p64
    %s67 = sadd.s32 %s66, 1
    %p70 = scmp.eq.s32.totalorder %s11, 1
    %p71 = scmp.ne.s32.totalorder %s66, %s68
    %p72 = scmp.eq.s32.totalorder %s11, 0
    %p73 = por %p71, %p72
    %p74 = scmp.ne.s32.totalorder %s66, %s68
    %p75 = scmp.eq.s32.totalorder %s16, 1
    %p76 = por %p74, %p75
    %p77 = scmp.ne.s32.totalorder %s68, %s69
    %p78 = scmp.eq.s32.totalorder %s16, 0
    %p79 = por %p77, %p78
    %p80 = scmp.ne.s32.totalorder %s68, %s69
    %p81 = scmp.eq.s32.totalorder %s17, 1
    %p82 = por %p80, %p81
    %p84 = scmp.ne.s32.totalorder %s69, %s83
    %p85 = scmp.eq.s32.totalorder %s17, 0
    %p86 = por %p84, %p85
    %s88 = sadd.s32 %s87, 1
    %p91 = scmp.eq.s32.totalorder %s11, 1
    %p92 = scmp.ne.s32.totalorder %s87, %s89
    %p93 = scmp.eq.s32.totalorder %s11, 0
    %p94 = por %p92, %p93
    %p95 = scmp.ne.s32.totalorder %s87, %s89
    %p96 = scmp.eq.s32.totalorder %s16, 1
    %p97 = por %p95, %p96
    %p98 = scmp.ne.s32.totalorder %s89, %s90
    %p99 = scmp.eq.s32.totalorder %s16, 0
    %p100 = por %p98, %p99
    %p101 = scmp.ne.s32.totalorder %s89, %s90
    %p102 = scmp.eq.s32.totalorder %s17, 1
    %p103 = por %p101, %p102
    %p105 = scmp.ne.s32.totalorder %s90, %s104
    %p106 = scmp.eq.s32.totalorder %s17, 0
    %p107 = por %p105, %p106
    %s109 = sadd.s32 %s108, 1
    %p112 = scmp.eq.s32.totalorder %s11, 1
    %p113 = scmp.ne.s32.totalorder %s108, %s110
    %p114 = scmp.eq.s32.totalorder %s11, 0
    %p115 = por %p113, %p114
    %p116 = scmp.ne.s32.totalorder %s108, %s110
    %p117 = scmp.eq.s32.totalorder %s16, 1
    %p118 = por %p116, %p117
    %p119 = scmp.ne.s32.totalorder %s110, %s111
    %p120 = scmp.eq.s32.totalorder %s16, 0
    %p121 = por %p119, %p120
    %p122 = scmp.ne.s32.totalorder %s110, %s111
    %p123 = scmp.eq.s32.totalorder %s17, 1
    %p124 = por %p122, %p123
    %p126 = scmp.ne.s32.totalorder %s111, %s125
    %p127 = scmp.eq.s32.totalorder %s17, 0
    %p128 = por %p126, %p127
    %s129 = ssub.s32 %s11, %s18
    %p130 = scmp.eq.s32.totalorder %s129, 0
    %s132 = sadd.s32 %s131, 1
    %s133 = scalar_select %p130, %s131, %s132
    %p136 = pneg %p130
    %p137 = scmp.eq.s32.totalorder %s11, 1
    %p138 = por %p136, %p137
    %p139 = scmp.ne.s32.totalorder %s131, %s134
    %p140 = scmp.eq.s32.totalorder %s11, 0
    %p141 = por %p139, %p140
    %p142 = scmp.ne.s32.totalorder %s131, %s134
    %p143 = scmp.eq.s32.totalorder %s16, 1
    %p144 = por %p142, %p143
    %p145 = scmp.ne.s32.totalorder %s134, %s135
    %p146 = scmp.eq.s32.totalorder %s16, 0
    %p147 = por %p145, %p146
    %p148 = scmp.ne.s32.totalorder %s134, %s135
    %p149 = scmp.eq.s32.totalorder %s17, 1
    %p150 = por %p148, %p149
    %p152 = scmp.ne.s32.totalorder %s135, %s151
    %p153 = scmp.eq.s32.totalorder %s17, 0
    %p154 = por %p152, %p153
    %p155 = scmp.le.s32.totalorder 1, %s11
    %p156 = scmp.lt.s32.totalorder %s11, 3
    %p157 = pnand %p155, %p156
    %p158 = pneg %p157
    // Predicated region
    $region9: #{feature_extract_forward.1} parent=5 // pred_check
      _
    $region10: #{feature_extract_forward.1} parent=5 // pred_check_branch
      %160 = sbr.rel (%p157) target = $region12
    $region11: #{feature_extract_forward.1} parent=5 // pred_region
      %s161 = ssub.s32 %s11, 1
      // Predicated region
      $region13: #{feature_extract_forward.1} parent=11 // pred_check
        %p162 = pneg %p58
      $region14: #{feature_extract_forward.1} parent=11 // pred_check_branch
        %164 = sbr.rel (%p162) target = $region16
      $region15: #{feature_extract_forward.1} parent=11 // pred_region
        _
      $region16: #{feature_extract_forward.1} parent=11 // pred_fallthru
        _
      // Predicated region
      $region17: #{feature_extract_forward.1} parent=11 // pred_check
        %p165 = pneg %p79
      $region18: #{feature_extract_forward.1} parent=11 // pred_check_branch
        %167 = sbr.rel (%p165) target = $region20
      $region19: #{feature_extract_forward.1} parent=11 // pred_region
        _
      $region20: #{feature_extract_forward.1} parent=11 // pred_fallthru
        _
      // Predicated region
      $region21: #{feature_extract_forward.1} parent=11 // pred_check
        %p168 = pneg %p100
      $region22: #{feature_extract_forward.1} parent=11 // pred_check_branch
        %170 = sbr.rel (%p168) target = $region24
      $region23: #{feature_extract_forward.1} parent=11 // pred_region
        _
      $region24: #{feature_extract_forward.1} parent=11 // pred_fallthru
        _
      // Predicated region
      $region25: #{feature_extract_forward.1} parent=11 // pred_check
        %p171 = pneg %p121
      $region26: #{feature_extract_forward.1} parent=11 // pred_check_branch
        %173 = sbr.rel (%p171) target = $region28
      $region27: #{feature_extract_forward.1} parent=11 // pred_region
        _
      $region28: #{feature_extract_forward.1} parent=11 // pred_fallthru
        _
    $region12: #{feature_extract_forward.1} parent=5 // pred_fallthru
      _
    %p174 = scmp.lt.s32.totalorder %s11, 2
    // Predicated region
    $region29: #{feature_extract_forward.1} parent=5 // pred_check
      %p175 = pneg %p174
    $region30: #{feature_extract_forward.1} parent=5 // pred_check_branch
      %177 = sbr.rel (%p175) target = $region32
    $region31: #{feature_extract_forward.1} parent=5 // pred_region
      // Predicated region
      $region33: #{feature_extract_forward.1} parent=31 // pred_check
        %p178 = pneg %p31
      $region34: #{feature_extract_forward.1} parent=31 // pred_check_branch
        %180 = sbr.rel (%p178) target = $region36
      $region35: #{feature_extract_forward.1} parent=31 // pred_region
        %s181 = smul.u32 2, %s11
        %p182 = scmp.lt.s32.totalorder %s181, 3
        %s183 = scalar_select %p182, %s181, 3
        %s184 = smul.addr %s183, 4
        %s185 = scalar_lea.vmem %s0, %s184
        %s186 = smul.u32 2, %s11
      $region36: #{feature_extract_forward.1} parent=31 // pred_fallthru
        _
    $region32: #{feature_extract_forward.1} parent=5 // pred_fallthru
      _
    %p187 = scmp.le.s32.totalorder 1, %s11
    %p188 = scmp.lt.s32.totalorder %s11, 3
    %p189 = pnand %p187, %p188
    %p190 = pneg %p189
    // Predicated region
    $region37: #{feature_extract_forward.1} parent=5 // pred_check
      _
    $region38: #{feature_extract_forward.1} parent=5 // pred_check_branch
      %192 = sbr.rel (%p189) target = $region40
    $region39: #{feature_extract_forward.1} parent=5 // pred_region
      %s193 = ssub.s32 %s11, 1
      %s194 = smul.u32 2, %s16
      %p195 = scmp.lt.s32.totalorder %s194, 3
      %s196 = scalar_select %p195, %s194, 3
      %s197 = smul.addr %s196, 4
      %s198 = scalar_lea.vmem %s0, %s197
      %p199 = pneg %p37
      %p200 = pneg %p34
      %p201 = pneg %p58
      %p202 = pneg %p55
      %p203 = pneg %p79
      %p204 = pneg %p76
      %p205 = pneg %p100
      %p206 = pneg %p97
      %p207 = pneg %p121
      %p208 = pneg %p118
      %p209 = pneg %p147
      %p210 = pneg %p144
      %s211 = smul.u32 2, %s16
      %p212 = scmp.lt.s32.totalorder %s211, 3
      %s213 = scalar_select %p212, %s211, 3
      %s214 = smul.addr %s213, 8
      %s215 = scalar_lea.vmem %s5, %s214
      %s216 = smul.u32 2, %s16
      %p217 = scmp.lt.s32.totalorder %s216, 3
      %s218 = scalar_select %p217, %s216, 3
      %s219 = smul.addr %s218, 4
      %s220 = scalar_lea.vmem %s0, %s219
      %s221 = smul.u32 2, %s16
      %s222 = smul.u32 2, %s16
      %p223 = scmp.lt.s32.totalorder %s222, 3
      %s224 = scalar_select %p223, %s222, 3
      %s225 = smul.addr %s224, 8
      %s226 = scalar_lea.vmem %s5, %s225
      %s227 = smul.u32 2, %s16
      %228 = vst [vmem:[#allocation2 + $0x90] sm:$0xff] 1.0
      %229 = vst [vmem:[#allocation2 + $0x98] sm:$0xff] 1.0
      %v230 = vld [vmem:[%s1] sm:$0xff]
      %v231 = vld [vmem:[%s220] sm:$0xff]
      %v232 = vld [vmem:[%s2] sm:$0xff]
      %234 = vset.pattern.permute.xlu0 0
      %235 = vperm.xlu0 %234, %v232
      %v236 = vpop.permute.xlu0 %235
      %v239 = vcombine.high %v231, %v231
      %vm240 = vcmask 31744
      %v242 = vsel %vm240, %v230, 0
      %vm244 = vcmask 1043456
      %v245 = vsel %vm244, %v231, 0
      %v247 = vsel %vm244, %v239, 0
      %249 = vmatprep.subr.mxu0 0.0
      %250 = vmatpush1.msra.mxu0 0.0
      %251 = vmatprep.subr.mxu0 0.0
      %252 = vmatpush1.msra.mxu0 0.0
      %253 = vmatprep.subr.mxu0 0.0
      %254 = vmatpush1.msra.mxu0 0.0
      %255 = vmatprep.subr.mxu0 0.0
      %256 = vmatpush1.msra.mxu0 0.0
      %257 = vmatprep.subr.mxu0 0.0
      %258 = vmatpush1.msra.mxu0 0.0
      %259 = vmatprep.subr.mxu0 0.0
      %260 = vmatpush1.msra.mxu0 0.0
      %261 = vmatprep.subr.mxu0 0.0
      %262 = vmatpush1.msra.mxu0 0.0
      %263 = vmatprep.subr.mxu0 0.0
      %264 = vmatpush1.msra.mxu0 0.0
      %265 = vmatprep.subr.mxu0 0.0
      %266 = vmatpush1.msra.mxu0 0.0
      %267 = vmatprep.subr.mxu0 0.0
      %268 = vmatpush1.msra.mxu0 0.0
      %269 = vmatprep.subr.mxu0 0.0
      %270 = vmatpush1.msra.mxu0 0.0
      %271 = vmatprep.subr.mxu0 0.0
      %272 = vmatpush1.msra.mxu0 0.0
      %273 = vmatprep.subr.mxu0 0.0
      %274 = vmatpush1.msra.mxu0 0.0
      %275 = vmatprep.subr.mxu0 0.0
      %276 = vmatpush1.msra.mxu0 0.0
      %277 = vmatprep.subr.mxu0 0.0
      %278 = vmatpush1.msra.mxu0 0.0
      %279 = vmatprep.subr.mxu0 %v247
      %280 = vmatpush1.msra.mxu0 %v245
      %281 = vmatprep.subr.mxu0 0.0
      %282 = vmatpush2.msra.mxu0 0.0
      %283 = vmatprep.subr.mxu0 0.0
      %284 = vmatpush2.msra.mxu0 0.0
      %285 = vmatprep.subr.mxu0 0.0
      %286 = vmatpush2.msra.mxu0 0.0
      %287 = vmatprep.subr.mxu0 0.0
      %288 = vmatpush2.msra.mxu0 0.0
      %289 = vmatprep.subr.mxu0 0.0
      %290 = vmatpush2.msra.mxu0 0.0
      %291 = vmatprep.subr.mxu0 0.0
      %292 = vmatpush2.msra.mxu0 0.0
      %293 = vmatprep.subr.mxu0 0.0
      %294 = vmatpush2.msra.mxu0 0.0
      %295 = vmatprep.subr.mxu0 0.0
      %296 = vmatpush2.msra.mxu0 0.0
      %297 = vmatprep.subr.mxu0 0.0
      %298 = vmatpush2.msra.mxu0 0.0
      %299 = vmatprep.subr.mxu0 0.0
      %300 = vmatpush2.msra.mxu0 0.0
      %301 = vmatprep.subr.mxu0 0.0
      %302 = vmatpush2.msra.mxu0 0.0
      %303 = vmatprep.subr.mxu0 0.0
      %304 = vmatpush2.msra.mxu0 0.0
      %305 = vmatprep.subr.mxu0 0.0
      %306 = vmatpush2.msra.mxu0 0.0
      %307 = vmatprep.subr.mxu0 0.0
      %308 = vmatpush2.msra.mxu0 0.0
      %309 = vmatprep.subr.mxu0 0.0
      %310 = vmatpush2.msra.mxu0 0.0
      %311 = vmatprep.subr.mxu0 0.0
      %312 = vmatpush2.msra.mxu0 0.0
      %313 = vmatprep.mubr.f32.mxu0 0.0
      %314 = vmatmul.mubr.f32.gmra.mxu0 %v242
      %v315 = vpop.f32.mrf.mxu0
      %v316 = vadd.f32 %v236, %v315
      %v317 = vpop.f32.mrf.mxu0
      %v318 = vadd.f32 %v236, %v317
      %319 = vdwg.mxu0
      %v320 = vld [vmem:[%s3] sm:$0xff]
      %v321 = vld [vmem:[%s3 + $0x8] sm:$0xff]
      %v322 = vld [vmem:[%s3 + $0x10] sm:$0xff]
      %v323 = vld [vmem:[%s3 + $0x18] sm:$0xff]
      %324 = vrot.lane.b32.xlu0 %v316, 17
      %v325 = vpop.permute.xlu0 %324
      %326 = vrot.lane.b32.xlu0 %v318, 17
      %v327 = vpop.permute.xlu0 %326
      %v328 = vlaneseq
      %v329 = vand.u32 %v328, 127
      %vm330 = vcmp.lt.s32.totalorder %v329, 17
      %v331 = vsel %vm330, %v325, %v327
      %v332 = vsel %vm330, %v327, %v325
      %v333 = vld [vmem:[%s4] sm:$0xff]
      %v334 = vld [vmem:[%s4 + $0x8] sm:$0xff]
      %v335 = vmul.f32 %v332, %v333
      %v336 = vmul.f32 %v331, %v334
      %337 = vst [vmem:[#allocation2] sm:$0xff] %v335
      %338 = vst [vmem:[#allocation2 + $0x8] sm:$0xff] %v336
      %339 = vrot.lane.b32.xlu0 %v316, 16
      %v340 = vpop.permute.xlu0 %339
      %341 = vrot.lane.b32.xlu0 %v318, 16
      %v342 = vpop.permute.xlu0 %341
      %vm343 = vcmp.lt.s32.totalorder %v329, 16
      %v344 = vsel %vm343, %v340, %v342
      %v345 = vsel %vm343, %v342, %v340
      %s346 = scalar_lea.vmem %s4, 16
      %v347 = vld [vmem:[%s346] sm:$0xff]
      %v348 = vld [vmem:[%s346 + $0x8] sm:$0xff]
      %v349 = vmul.f32 %v345, %v347
      %v350 = vmul.f32 %v344, %v348
      %351 = vst [vmem:[#allocation2 + $0x10] sm:$0xff] %v349
      %352 = vst [vmem:[#allocation2 + $0x18] sm:$0xff] %v350
      %353 = vrot.lane.b32.xlu0 %v316, 15
      %v354 = vpop.permute.xlu0 %353
      %355 = vrot.lane.b32.xlu0 %v318, 15
      %v356 = vpop.permute.xlu0 %355
      %vm357 = vcmp.lt.s32.totalorder %v329, 15
      %v358 = vsel %vm357, %v354, %v356
      %v359 = vsel %vm357, %v356, %v354
      %s360 = scalar_lea.vmem %s4, 32
      %v361 = vld [vmem:[%s360] sm:$0xff]
      %v362 = vld [vmem:[%s360 + $0x8] sm:$0xff]
      %v363 = vmul.f32 %v359, %v361
      %v364 = vmul.f32 %v358, %v362
      %365 = vst [vmem:[#allocation2 + $0x20] sm:$0xff] %v363
      %366 = vst [vmem:[#allocation2 + $0x28] sm:$0xff] %v364
      %367 = vrot.lane.b32.xlu0 %v316, 1
      %v368 = vpop.permute.xlu0 %367
      %369 = vrot.lane.b32.xlu0 %v318, 1
      %v370 = vpop.permute.xlu0 %369
      %vm371 = vcmp.lt.s32.totalorder %v329, 1
      %v372 = vsel %vm371, %v368, %v370
      %v373 = vsel %vm371, %v370, %v368
      %s374 = scalar_lea.vmem %s4, 48
      %v375 = vld [vmem:[%s374] sm:$0xff]
      %v376 = vld [vmem:[%s374 + $0x8] sm:$0xff]
      %v377 = vmul.f32 %v373, %v375
      %v378 = vmul.f32 %v372, %v376
      %379 = vst [vmem:[#allocation2 + $0x30] sm:$0xff] %v377
      %380 = vst [vmem:[#allocation2 + $0x38] sm:$0xff] %v378
      %381 = vst [vmem:[#allocation2 + $0x40] sm:$0xff] %v316
      %382 = vst [vmem:[#allocation2 + $0x48] sm:$0xff] %v318
      %383 = vrot.lane.b32.xlu0 %v316, 127
      %v384 = vpop.permute.xlu0 %383
      %385 = vrot.lane.b32.xlu0 %v318, 127
      %v386 = vpop.permute.xlu0 %385
      %vm387 = vcmp.lt.s32.totalorder %v329, 127
      %v388 = vsel %vm387, %v384, %v386
      %v389 = vsel %vm387, %v386, %v384
      %s390 = scalar_lea.vmem %s4, 80
      %v391 = vld [vmem:[%s390] sm:$0xff]
      %v392 = vld [vmem:[%s390 + $0x8] sm:$0xff]
      %v393 = vmul.f32 %v388, %v391
      %v394 = vmul.f32 %v389, %v392
      %395 = vst [vmem:[#allocation2 + $0x50] sm:$0xff] %v393
      %396 = vst [vmem:[#allocation2 + $0x58] sm:$0xff] %v394
      %397 = vrot.lane.b32.xlu0 %v316, 113
      %v398 = vpop.permute.xlu0 %397
      %399 = vrot.lane.b32.xlu0 %v318, 113
      %v400 = vpop.permute.xlu0 %399
      %vm401 = vcmp.lt.s32.totalorder %v329, 113
      %v402 = vsel %vm401, %v398, %v400
      %v403 = vsel %vm401, %v400, %v398
      %s404 = scalar_lea.vmem %s4, 96
      %v405 = vld [vmem:[%s404] sm:$0xff]
      %v406 = vld [vmem:[%s404 + $0x8] sm:$0xff]
      %v407 = vmul.f32 %v402, %v405
      %v408 = vmul.f32 %v403, %v406
      %409 = vst [vmem:[#allocation2 + $0x60] sm:$0xff] %v407
      %410 = vst [vmem:[#allocation2 + $0x68] sm:$0xff] %v408
      %411 = vrot.lane.b32.xlu0 %v316, 112
      %v412 = vpop.permute.xlu0 %411
      %413 = vrot.lane.b32.xlu0 %v318, 112
      %v414 = vpop.permute.xlu0 %413
      %vm415 = vcmp.lt.s32.totalorder %v329, 112
      %v416 = vsel %vm415, %v412, %v414
      %v417 = vsel %vm415, %v414, %v412
      %s418 = scalar_lea.vmem %s4, 112
      %v419 = vld [vmem:[%s418] sm:$0xff]
      %v420 = vld [vmem:[%s418 + $0x8] sm:$0xff]
      %v421 = vmul.f32 %v416, %v419
      %v422 = vmul.f32 %v417, %v420
      %423 = vst [vmem:[#allocation2 + $0x70] sm:$0xff] %v421
      %424 = vst [vmem:[#allocation2 + $0x78] sm:$0xff] %v422
      %425 = vrot.lane.b32.xlu0 %v316, 111
      %v426 = vpop.permute.xlu0 %425
      %427 = vrot.lane.b32.xlu0 %v318, 111
      %v428 = vpop.permute.xlu0 %427
      %vm429 = vcmp.lt.s32.totalorder %v329, 111
      %v430 = vsel %vm429, %v426, %v428
      %v431 = vsel %vm429, %v428, %v426
      %s432 = scalar_lea.vmem %s4, 128
      %v433 = vld [vmem:[%s432] sm:$0xff]
      %v434 = vld [vmem:[%s432 + $0x8] sm:$0xff]
      %v435 = vmul.f32 %v430, %v433
      %v436 = vmul.f32 %v431, %v434
      %437 = vst [vmem:[#allocation2 + $0x80] sm:$0xff] %v435
      %438 = vst [vmem:[#allocation2 + $0x88] sm:$0xff] %v436
      %v439 = vld [vmem:[#allocation2] sm:$0xff]
      %v440 = vld [vmem:[#allocation2 + $0x8] sm:$0xff]
      %v441 = vld [vmem:[#allocation2 + $0x10] sm:$0xff]
      %v442 = vld [vmem:[#allocation2 + $0x18] sm:$0xff]
      %v443 = vld [vmem:[#allocation2 + $0x20] sm:$0xff]
      %v444 = vld [vmem:[#allocation2 + $0x28] sm:$0xff]
      %v445 = vld [vmem:[#allocation2 + $0x30] sm:$0xff]
      %v446 = vld [vmem:[#allocation2 + $0x38] sm:$0xff]
      %v447 = vld [vmem:[#allocation2 + $0x40] sm:$0xff]
      %v448 = vld [vmem:[#allocation2 + $0x48] sm:$0xff]
      %v449 = vld [vmem:[#allocation2 + $0x50] sm:$0xff]
      %v450 = vld [vmem:[#allocation2 + $0x58] sm:$0xff]
      %v451 = vld [vmem:[#allocation2 + $0x60] sm:$0xff]
      %v452 = vld [vmem:[#allocation2 + $0x68] sm:$0xff]
      %v453 = vld [vmem:[#allocation2 + $0x70] sm:$0xff]
      %v454 = vld [vmem:[#allocation2 + $0x78] sm:$0xff]
      %v455 = vld [vmem:[#allocation2 + $0x80] sm:$0xff]
      %v456 = vld [vmem:[#allocation2 + $0x88] sm:$0xff]
      %v457 = vld [vmem:[#allocation2 + $0x90] sm:$0xff]
      %v458 = vld [vmem:[#allocation2 + $0x98] sm:$0xff]
      %vm459 = vcmask 654336
      %v461 = vsel %vm459, %v320, 0
      %463 = vmatprep.subr.mxu0 0.0
      %464 = vmatpush1.msra.mxu0 0.0
      %465 = vmatprep.subr.mxu0 0.0
      %466 = vmatpush1.msra.mxu0 0.0
      %467 = vmatprep.subr.mxu0 0.0
      %468 = vmatpush1.msra.mxu0 0.0
      %469 = vmatprep.subr.mxu0 0.0
      %470 = vmatpush1.msra.mxu0 0.0
      %471 = vmatprep.subr.mxu0 0.0
      %472 = vmatpush1.msra.mxu0 0.0
      %473 = vmatprep.subr.mxu0 0.0
      %474 = vmatpush1.msra.mxu0 0.0
      %475 = vmatprep.subr.mxu0 %v458
      %476 = vmatpush1.msra.mxu0 %v457
      %477 = vmatprep.subr.mxu0 %v456
      %478 = vmatpush1.msra.mxu0 %v455
      %479 = vmatprep.subr.mxu0 %v454
      %480 = vmatpush1.msra.mxu0 %v453
      %481 = vmatprep.subr.mxu0 %v452
      %482 = vmatpush1.msra.mxu0 %v451
      %483 = vmatprep.subr.mxu0 %v450
      %484 = vmatpush1.msra.mxu0 %v449
      %485 = vmatprep.subr.mxu0 %v448
      %486 = vmatpush1.msra.mxu0 %v447
      %487 = vmatprep.subr.mxu0 %v446
      %488 = vmatpush1.msra.mxu0 %v445
      %489 = vmatprep.subr.mxu0 %v444
      %490 = vmatpush1.msra.mxu0 %v443
      %491 = vmatprep.subr.mxu0 %v442
      %492 = vmatpush1.msra.mxu0 %v441
      %493 = vmatprep.subr.mxu0 %v440
      %494 = vmatpush1.msra.mxu0 %v439
      %495 = vmatprep.subr.mxu0 0.0
      %496 = vmatpush2.msra.mxu0 0.0
      %497 = vmatprep.subr.mxu0 0.0
      %498 = vmatpush2.msra.mxu0 0.0
      %499 = vmatprep.subr.mxu0 0.0
      %500 = vmatpush2.msra.mxu0 0.0
      %501 = vmatprep.subr.mxu0 0.0
      %502 = vmatpush2.msra.mxu0 0.0
      %503 = vmatprep.subr.mxu0 0.0
      %504 = vmatpush2.msra.mxu0 0.0
      %505 = vmatprep.subr.mxu0 0.0
      %506 = vmatpush2.msra.mxu0 0.0
      %507 = vmatprep.subr.mxu0 0.0
      %508 = vmatpush2.msra.mxu0 0.0
      %509 = vmatprep.subr.mxu0 0.0
      %510 = vmatpush2.msra.mxu0 0.0
      %511 = vmatprep.subr.mxu0 0.0
      %512 = vmatpush2.msra.mxu0 0.0
      %513 = vmatprep.subr.mxu0 0.0
      %514 = vmatpush2.msra.mxu0 0.0
      %515 = vmatprep.subr.mxu0 0.0
      %516 = vmatpush2.msra.mxu0 0.0
      %517 = vmatprep.subr.mxu0 0.0
      %518 = vmatpush2.msra.mxu0 0.0
      %519 = vmatprep.subr.mxu0 0.0
      %520 = vmatpush2.msra.mxu0 0.0
      %521 = vmatprep.subr.mxu0 0.0
      %522 = vmatpush2.msra.mxu0 0.0
      %523 = vmatprep.subr.mxu0 0.0
      %524 = vmatpush2.msra.mxu0 0.0
      %525 = vmatprep.subr.mxu0 0.0
      %526 = vmatpush2.msra.mxu0 0.0
      %527 = vmatprep.mubr.f32.mxu0 0.0
      %528 = vmatmul.mubr.f32.gmra.mxu0 %v461
      %v529 = vpop.f32.mrf.mxu0
      %v530 = vadd.f32 0.0, %v529
      %v531 = vpop.f32.mrf.mxu0
      %v532 = vadd.f32 0.0, %v531
      %533 = vdwg.mxu0
      %534 = vrot.lane.b32.xlu0 %v530, 17
      %v535 = vpop.permute.xlu0 %534
      %536 = vrot.lane.b32.xlu0 %v532, 17
      %v537 = vpop.permute.xlu0 %536
      %v538 = vsel %vm330, %v535, %v537
      %v539 = vsel %vm330, %v537, %v535
      %v540 = vld [vmem:[%s4] sm:$0xff]
      %v541 = vld [vmem:[%s4 + $0x8] sm:$0xff]
      %v542 = vmul.f32 %v539, %v540
      %v543 = vmul.f32 %v538, %v541
      %544 = vst [vmem:[#allocation2] sm:$0xff] %v542
      %545 = vst [vmem:[#allocation2 + $0x8] sm:$0xff] %v543
      %546 = vrot.lane.b32.xlu0 %v530, 16
      %v547 = vpop.permute.xlu0 %546
      %548 = vrot.lane.b32.xlu0 %v532, 16
      %v549 = vpop.permute.xlu0 %548
      %v550 = vsel %vm343, %v547, %v549
      %v551 = vsel %vm343, %v549, %v547
      %v552 = vld [vmem:[%s346] sm:$0xff]
      %v553 = vld [vmem:[%s346 + $0x8] sm:$0xff]
      %v554 = vmul.f32 %v551, %v552
      %v555 = vmul.f32 %v550, %v553
      %556 = vst [vmem:[#allocation2 + $0x10] sm:$0xff] %v554
      %557 = vst [vmem:[#allocation2 + $0x18] sm:$0xff] %v555
      %558 = vrot.lane.b32.xlu0 %v530, 15
      %v559 = vpop.permute.xlu0 %558
      %560 = vrot.lane.b32.xlu0 %v532, 15
      %v561 = vpop.permute.xlu0 %560
      %v562 = vsel %vm357, %v559, %v561
      %v563 = vsel %vm357, %v561, %v559
      %v564 = vld [vmem:[%s360] sm:$0xff]
      %v565 = vld [vmem:[%s360 + $0x8] sm:$0xff]
      %v566 = vmul.f32 %v563, %v564
      %v567 = vmul.f32 %v562, %v565
      %568 = vst [vmem:[#allocation2 + $0x20] sm:$0xff] %v566
      %569 = vst [vmem:[#allocation2 + $0x28] sm:$0xff] %v567
      %570 = vrot.lane.b32.xlu0 %v530, 1
      %v571 = vpop.permute.xlu0 %570
      %572 = vrot.lane.b32.xlu0 %v532, 1
      %v573 = vpop.permute.xlu0 %572
      %v574 = vsel %vm371, %v571, %v573
      %v575 = vsel %vm371, %v573, %v571
      %v576 = vld [vmem:[%s374] sm:$0xff]
      %v577 = vld [vmem:[%s374 + $0x8] sm:$0xff]
      %v578 = vmul.f32 %v575, %v576
      %v579 = vmul.f32 %v574, %v577
      %580 = vst [vmem:[#allocation2 + $0x30] sm:$0xff] %v578
      %581 = vst [vmem:[#allocation2 + $0x38] sm:$0xff] %v579
      %582 = vst [vmem:[#allocation2 + $0x40] sm:$0xff] %v530
      %583 = vst [vmem:[#allocation2 + $0x48] sm:$0xff] %v532
      %584 = vrot.lane.b32.xlu0 %v530, 127
      %v585 = vpop.permute.xlu0 %584
      %586 = vrot.lane.b32.xlu0 %v532, 127
      %v587 = vpop.permute.xlu0 %586
      %v588 = vsel %vm387, %v585, %v587
      %v589 = vsel %vm387, %v587, %v585
      %v590 = vld [vmem:[%s390] sm:$0xff]
      %v591 = vld [vmem:[%s390 + $0x8] sm:$0xff]
      %v592 = vmul.f32 %v588, %v590
      %v593 = vmul.f32 %v589, %v591
      %594 = vst [vmem:[#allocation2 + $0x50] sm:$0xff] %v592
      %595 = vst [vmem:[#allocation2 + $0x58] sm:$0xff] %v593
      %596 = vrot.lane.b32.xlu0 %v530, 113
      %v597 = vpop.permute.xlu0 %596
      %598 = vrot.lane.b32.xlu0 %v532, 113
      %v599 = vpop.permute.xlu0 %598
      %v600 = vsel %vm401, %v597, %v599
      %v601 = vsel %vm401, %v599, %v597
      %v602 = vld [vmem:[%s404] sm:$0xff]
      %v603 = vld [vmem:[%s404 + $0x8] sm:$0xff]
      %v604 = vmul.f32 %v600, %v602
      %v605 = vmul.f32 %v601, %v603
      %606 = vst [vmem:[#allocation2 + $0x60] sm:$0xff] %v604
      %607 = vst [vmem:[#allocation2 + $0x68] sm:$0xff] %v605
      %608 = vrot.lane.b32.xlu0 %v530, 112
      %v609 = vpop.permute.xlu0 %608
      %610 = vrot.lane.b32.xlu0 %v532, 112
      %v611 = vpop.permute.xlu0 %610
      %v612 = vsel %vm415, %v609, %v611
      %v613 = vsel %vm415, %v611, %v609
      %v614 = vld [vmem:[%s418] sm:$0xff]
      %v615 = vld [vmem:[%s418 + $0x8] sm:$0xff]
      %v616 = vmul.f32 %v612, %v614
      %v617 = vmul.f32 %v613, %v615
      %618 = vst [vmem:[#allocation2 + $0x70] sm:$0xff] %v616
      %619 = vst [vmem:[#allocation2 + $0x78] sm:$0xff] %v617
      %620 = vrot.lane.b32.xlu0 %v530, 111
      %v621 = vpop.permute.xlu0 %620
      %622 = vrot.lane.b32.xlu0 %v532, 111
      %v623 = vpop.permute.xlu0 %622
      %v624 = vsel %vm429, %v621, %v623
      %v625 = vsel %vm429, %v623, %v621
      %v626 = vld [vmem:[%s432] sm:$0xff]
      %v627 = vld [vmem:[%s432 + $0x8] sm:$0xff]
      %v628 = vmul.f32 %v624, %v626
      %v629 = vmul.f32 %v625, %v627
      %630 = vst [vmem:[#allocation2 + $0x80] sm:$0xff] %v628
      %631 = vst [vmem:[#allocation2 + $0x88] sm:$0xff] %v629
      %v632 = vld [vmem:[#allocation2] sm:$0xff]
      %v633 = vld [vmem:[#allocation2 + $0x8] sm:$0xff]
      %v634 = vld [vmem:[#allocation2 + $0x10] sm:$0xff]
      %v635 = vld [vmem:[#allocation2 + $0x18] sm:$0xff]
      %v636 = vld [vmem:[#allocation2 + $0x20] sm:$0xff]
      %v637 = vld [vmem:[#allocation2 + $0x28] sm:$0xff]
      %v638 = vld [vmem:[#allocation2 + $0x30] sm:$0xff]
      %v639 = vld [vmem:[#allocation2 + $0x38] sm:$0xff]
      %v640 = vld [vmem:[#allocation2 + $0x40] sm:$0xff]
      %v641 = vld [vmem:[#allocation2 + $0x48] sm:$0xff]
      %v642 = vld [vmem:[#allocation2 + $0x50] sm:$0xff]
      %v643 = vld [vmem:[#allocation2 + $0x58] sm:$0xff]
      %v644 = vld [vmem:[#allocation2 + $0x60] sm:$0xff]
      %v645 = vld [vmem:[#allocation2 + $0x68] sm:$0xff]
      %v646 = vld [vmem:[#allocation2 + $0x70] sm:$0xff]
      %v647 = vld [vmem:[#allocation2 + $0x78] sm:$0xff]
      %v648 = vld [vmem:[#allocation2 + $0x80] sm:$0xff]
      %v649 = vld [vmem:[#allocation2 + $0x88] sm:$0xff]
      %v650 = vld [vmem:[#allocation2 + $0x90] sm:$0xff]
      %v651 = vld [vmem:[#allocation2 + $0x98] sm:$0xff]
      %v653 = vsel %vm459, %v321, 0
      %v656 = vsel %vm459, %v322, 0
      %658 = vmatprep.subr.mxu0 0.0
      %659 = vmatpush1.msra.mxu0 0.0
      %660 = vmatprep.subr.mxu0 0.0
      %661 = vmatpush1.msra.mxu0 0.0
      %662 = vmatprep.subr.mxu0 0.0
      %663 = vmatpush1.msra.mxu0 0.0
      %664 = vmatprep.subr.mxu0 0.0
      %665 = vmatpush1.msra.mxu0 0.0
      %666 = vmatprep.subr.mxu0 0.0
      %667 = vmatpush1.msra.mxu0 0.0
      %668 = vmatprep.subr.mxu0 0.0
      %669 = vmatpush1.msra.mxu0 0.0
      %670 = vmatprep.subr.mxu0 %v651
      %671 = vmatpush1.msra.mxu0 %v650
      %672 = vmatprep.subr.mxu0 %v649
      %673 = vmatpush1.msra.mxu0 %v648
      %674 = vmatprep.subr.mxu0 %v647
      %675 = vmatpush1.msra.mxu0 %v646
      %676 = vmatprep.subr.mxu0 %v645
      %677 = vmatpush1.msra.mxu0 %v644
      %678 = vmatprep.subr.mxu0 %v643
      %679 = vmatpush1.msra.mxu0 %v642
      %680 = vmatprep.subr.mxu0 %v641
      %681 = vmatpush1.msra.mxu0 %v640
      %682 = vmatprep.subr.mxu0 %v639
      %683 = vmatpush1.msra.mxu0 %v638
      %684 = vmatprep.subr.mxu0 %v637
      %685 = vmatpush1.msra.mxu0 %v636
      %686 = vmatprep.subr.mxu0 %v635
      %687 = vmatpush1.msra.mxu0 %v634
      %688 = vmatprep.subr.mxu0 %v633
      %689 = vmatpush1.msra.mxu0 %v632
      %690 = vmatprep.subr.mxu0 0.0
      %691 = vmatpush2.msra.mxu0 0.0
      %692 = vmatprep.subr.mxu0 0.0
      %693 = vmatpush2.msra.mxu0 0.0
      %694 = vmatprep.subr.mxu0 0.0
      %695 = vmatpush2.msra.mxu0 0.0
      %696 = vmatprep.subr.mxu0 0.0
      %697 = vmatpush2.msra.mxu0 0.0
      %698 = vmatprep.subr.mxu0 0.0
      %699 = vmatpush2.msra.mxu0 0.0
      %700 = vmatprep.subr.mxu0 0.0
      %701 = vmatpush2.msra.mxu0 0.0
      %702 = vmatprep.subr.mxu0 0.0
      %703 = vmatpush2.msra.mxu0 0.0
      %704 = vmatprep.subr.mxu0 0.0
      %705 = vmatpush2.msra.mxu0 0.0
      %706 = vmatprep.subr.mxu0 0.0
      %707 = vmatpush2.msra.mxu0 0.0
      %708 = vmatprep.subr.mxu0 0.0
      %709 = vmatpush2.msra.mxu0 0.0
      %710 = vmatprep.subr.mxu0 0.0
      %711 = vmatpush2.msra.mxu0 0.0
      %712 = vmatprep.subr.mxu0 0.0
      %713 = vmatpush2.msra.mxu0 0.0
      %714 = vmatprep.subr.mxu0 0.0
      %715 = vmatpush2.msra.mxu0 0.0
      %716 = vmatprep.subr.mxu0 0.0
      %717 = vmatpush2.msra.mxu0 0.0
      %718 = vmatprep.subr.mxu0 0.0
      %719 = vmatpush2.msra.mxu0 0.0
      %720 = vmatprep.subr.mxu0 0.0
      %721 = vmatpush2.msra.mxu0 0.0
      %722 = vmatprep.mubr.f32.mxu0 0.0
      %723 = vmatmul.mubr.f32.gmra.mxu0 %v653
      %v724 = vpop.f32.mrf.mxu0
      %v725 = vadd.f32 0.0, %v724
      %v726 = vpop.f32.mrf.mxu0
      %v727 = vadd.f32 0.0, %v726
      %728 = vmatprep.mubr.f32.mxu0 0.0
      %729 = vmatmul.mubr.f32.gmra.mxu0 %v656
      %v730 = vpop.f32.mrf.mxu0
      %v731 = vadd.f32 0.0, %v730
      %v732 = vpop.f32.mrf.mxu0
      %v733 = vadd.f32 0.0, %v732
      %734 = vdwg.mxu0
      %v735 = vmax.f32 %v725, 0.0
      %v736 = vmax.f32 %v727, 0.0
      %737 = vrot.lane.b32.xlu0 %v735, 17
      %v738 = vpop.permute.xlu0 %737
      %739 = vrot.lane.b32.xlu0 %v736, 17
      %v740 = vpop.permute.xlu0 %739
      %v741 = vsel %vm330, %v738, %v740
      %v742 = vsel %vm330, %v740, %v738
      %v743 = vld [vmem:[%s4] sm:$0xff]
      %v744 = vld [vmem:[%s4 + $0x8] sm:$0xff]
      %v745 = vmul.f32 %v742, %v743
      %v746 = vmul.f32 %v741, %v744
      %747 = vst [vmem:[#allocation2] sm:$0xff] %v745
      %748 = vst [vmem:[#allocation2 + $0x8] sm:$0xff] %v746
      %749 = vrot.lane.b32.xlu0 %v735, 16
      %v750 = vpop.permute.xlu0 %749
      %751 = vrot.lane.b32.xlu0 %v736, 16
      %v752 = vpop.permute.xlu0 %751
      %v753 = vsel %vm343, %v750, %v752
      %v754 = vsel %vm343, %v752, %v750
      %v755 = vld [vmem:[%s346] sm:$0xff]
      %v756 = vld [vmem:[%s346 + $0x8] sm:$0xff]
      %v757 = vmul.f32 %v754, %v755
      %v758 = vmul.f32 %v753, %v756
      %759 = vst [vmem:[#allocation2 + $0x10] sm:$0xff] %v757
      %760 = vst [vmem:[#allocation2 + $0x18] sm:$0xff] %v758
      %761 = vrot.lane.b32.xlu0 %v735, 15
      %v762 = vpop.permute.xlu0 %761
      %763 = vrot.lane.b32.xlu0 %v736, 15
      %v764 = vpop.permute.xlu0 %763
      %v765 = vsel %vm357, %v762, %v764
      %v766 = vsel %vm357, %v764, %v762
      %v767 = vld [vmem:[%s360] sm:$0xff]
      %v768 = vld [vmem:[%s360 + $0x8] sm:$0xff]
      %v769 = vmul.f32 %v766, %v767
      %v770 = vmul.f32 %v765, %v768
      %771 = vst [vmem:[#allocation2 + $0x20] sm:$0xff] %v769
      %772 = vst [vmem:[#allocation2 + $0x28] sm:$0xff] %v770
      %773 = vrot.lane.b32.xlu0 %v735, 1
      %v774 = vpop.permute.xlu0 %773
      %775 = vrot.lane.b32.xlu0 %v736, 1
      %v776 = vpop.permute.xlu0 %775
      %v777 = vsel %vm371, %v774, %v776
      %v778 = vsel %vm371, %v776, %v774
      %v779 = vld [vmem:[%s374] sm:$0xff]
      %v780 = vld [vmem:[%s374 + $0x8] sm:$0xff]
      %v781 = vmul.f32 %v778, %v779
      %v782 = vmul.f32 %v777, %v780
      %783 = vst [vmem:[#allocation2 + $0x30] sm:$0xff] %v781
      %784 = vst [vmem:[#allocation2 + $0x38] sm:$0xff] %v782
      %785 = vst [vmem:[#allocation2 + $0x40] sm:$0xff] %v735
      %786 = vst [vmem:[#allocation2 + $0x48] sm:$0xff] %v736
      %787 = vrot.lane.b32.xlu0 %v735, 127
      %v788 = vpop.permute.xlu0 %787
      %789 = vrot.lane.b32.xlu0 %v736, 127
      %v790 = vpop.permute.xlu0 %789
      %v791 = vsel %vm387, %v788, %v790
      %v792 = vsel %vm387, %v790, %v788
      %v793 = vld [vmem:[%s390] sm:$0xff]
      %v794 = vld [vmem:[%s390 + $0x8] sm:$0xff]
      %v795 = vmul.f32 %v791, %v793
      %v796 = vmul.f32 %v792, %v794
      %797 = vst [vmem:[#allocation2 + $0x50] sm:$0xff] %v795
      %798 = vst [vmem:[#allocation2 + $0x58] sm:$0xff] %v796
      %799 = vrot.lane.b32.xlu0 %v735, 113
      %v800 = vpop.permute.xlu0 %799
      %801 = vrot.lane.b32.xlu0 %v736, 113
      %v802 = vpop.permute.xlu0 %801
      %v803 = vsel %vm401, %v800, %v802
      %v804 = vsel %vm401, %v802, %v800
      %v805 = vld [vmem:[%s404] sm:$0xff]
      %v806 = vld [vmem:[%s404 + $0x8] sm:$0xff]
      %v807 = vmul.f32 %v803, %v805
      %v808 = vmul.f32 %v804, %v806
      %809 = vst [vmem:[#allocation2 + $0x60] sm:$0xff] %v807
      %810 = vst [vmem:[#allocation2 + $0x68] sm:$0xff] %v808
      %811 = vrot.lane.b32.xlu0 %v735, 112
      %v812 = vpop.permute.xlu0 %811
      %813 = vrot.lane.b32.xlu0 %v736, 112
      %v814 = vpop.permute.xlu0 %813
      %v815 = vsel %vm415, %v812, %v814
      %v816 = vsel %vm415, %v814, %v812
      %v817 = vld [vmem:[%s418] sm:$0xff]
      %v818 = vld [vmem:[%s418 + $0x8] sm:$0xff]
      %v819 = vmul.f32 %v815, %v817
      %v820 = vmul.f32 %v816, %v818
      %821 = vst [vmem:[#allocation2 + $0x70] sm:$0xff] %v819
      %822 = vst [vmem:[#allocation2 + $0x78] sm:$0xff] %v820
      %823 = vrot.lane.b32.xlu0 %v735, 111
      %v824 = vpop.permute.xlu0 %823
      %825 = vrot.lane.b32.xlu0 %v736, 111
      %v826 = vpop.permute.xlu0 %825
      %v827 = vsel %vm429, %v824, %v826
      %v828 = vsel %vm429, %v826, %v824
      %v829 = vld [vmem:[%s432] sm:$0xff]
      %v830 = vld [vmem:[%s432 + $0x8] sm:$0xff]
      %v831 = vmul.f32 %v827, %v829
      %v832 = vmul.f32 %v828, %v830
      %833 = vst [vmem:[#allocation2 + $0x80] sm:$0xff] %v831
      %834 = vst [vmem:[#allocation2 + $0x88] sm:$0xff] %v832
      %v835 = vld [vmem:[#allocation2] sm:$0xff]
      %v836 = vld [vmem:[#allocation2 + $0x8] sm:$0xff]
      %v837 = vld [vmem:[#allocation2 + $0x10] sm:$0xff]
      %v838 = vld [vmem:[#allocation2 + $0x18] sm:$0xff]
      %v839 = vld [vmem:[#allocation2 + $0x20] sm:$0xff]
      %v840 = vld [vmem:[#allocation2 + $0x28] sm:$0xff]
      %v841 = vld [vmem:[#allocation2 + $0x30] sm:$0xff]
      %v842 = vld [vmem:[#allocation2 + $0x38] sm:$0xff]
      %v843 = vld [vmem:[#allocation2 + $0x40] sm:$0xff]
      %v844 = vld [vmem:[#allocation2 + $0x48] sm:$0xff]
      %v845 = vld [vmem:[#allocation2 + $0x50] sm:$0xff]
      %v846 = vld [vmem:[#allocation2 + $0x58] sm:$0xff]
      %v847 = vld [vmem:[#allocation2 + $0x60] sm:$0xff]
      %v848 = vld [vmem:[#allocation2 + $0x68] sm:$0xff]
      %v849 = vld [vmem:[#allocation2 + $0x70] sm:$0xff]
      %v850 = vld [vmem:[#allocation2 + $0x78] sm:$0xff]
      %v851 = vld [vmem:[#allocation2 + $0x80] sm:$0xff]
      %v852 = vld [vmem:[#allocation2 + $0x88] sm:$0xff]
      %v853 = vld [vmem:[#allocation2 + $0x90] sm:$0xff]
      %v854 = vld [vmem:[#allocation2 + $0x98] sm:$0xff]
      %v856 = vsel %vm459, %v323, 0
      %858 = vmatprep.subr.mxu0 0.0
      %859 = vmatpush1.msra.mxu0 0.0
      %860 = vmatprep.subr.mxu0 0.0
      %861 = vmatpush1.msra.mxu0 0.0
      %862 = vmatprep.subr.mxu0 0.0
      %863 = vmatpush1.msra.mxu0 0.0
      %864 = vmatprep.subr.mxu0 0.0
      %865 = vmatpush1.msra.mxu0 0.0
      %866 = vmatprep.subr.mxu0 0.0
      %867 = vmatpush1.msra.mxu0 0.0
      %868 = vmatprep.subr.mxu0 0.0
      %869 = vmatpush1.msra.mxu0 0.0
      %870 = vmatprep.subr.mxu0 %v854
      %871 = vmatpush1.msra.mxu0 %v853
      %872 = vmatprep.subr.mxu0 %v852
      %873 = vmatpush1.msra.mxu0 %v851
      %874 = vmatprep.subr.mxu0 %v850
      %875 = vmatpush1.msra.mxu0 %v849
      %876 = vmatprep.subr.mxu0 %v848
      %877 = vmatpush1.msra.mxu0 %v847
      %878 = vmatprep.subr.mxu0 %v846
      %879 = vmatpush1.msra.mxu0 %v845
      %880 = vmatprep.subr.mxu0 %v844
      %881 = vmatpush1.msra.mxu0 %v843
      %882 = vmatprep.subr.mxu0 %v842
      %883 = vmatpush1.msra.mxu0 %v841
      %884 = vmatprep.subr.mxu0 %v840
      %885 = vmatpush1.msra.mxu0 %v839
      %886 = vmatprep.subr.mxu0 %v838
      %887 = vmatpush1.msra.mxu0 %v837
      %888 = vmatprep.subr.mxu0 %v836
      %889 = vmatpush1.msra.mxu0 %v835
      %890 = vmatprep.subr.mxu0 0.0
      %891 = vmatpush2.msra.mxu0 0.0
      %892 = vmatprep.subr.mxu0 0.0
      %893 = vmatpush2.msra.mxu0 0.0
      %894 = vmatprep.subr.mxu0 0.0
      %895 = vmatpush2.msra.mxu0 0.0
      %896 = vmatprep.subr.mxu0 0.0
      %897 = vmatpush2.msra.mxu0 0.0
      %898 = vmatprep.subr.mxu0 0.0
      %899 = vmatpush2.msra.mxu0 0.0
      %900 = vmatprep.subr.mxu0 0.0
      %901 = vmatpush2.msra.mxu0 0.0
      %902 = vmatprep.subr.mxu0 0.0
      %903 = vmatpush2.msra.mxu0 0.0
      %904 = vmatprep.subr.mxu0 0.0
      %905 = vmatpush2.msra.mxu0 0.0
      %906 = vmatprep.subr.mxu0 0.0
      %907 = vmatpush2.msra.mxu0 0.0
      %908 = vmatprep.subr.mxu0 0.0
      %909 = vmatpush2.msra.mxu0 0.0
      %910 = vmatprep.subr.mxu0 0.0
      %911 = vmatpush2.msra.mxu0 0.0
      %912 = vmatprep.subr.mxu0 0.0
      %913 = vmatpush2.msra.mxu0 0.0
      %914 = vmatprep.subr.mxu0 0.0
      %915 = vmatpush2.msra.mxu0 0.0
      %916 = vmatprep.subr.mxu0 0.0
      %917 = vmatpush2.msra.mxu0 0.0
      %918 = vmatprep.subr.mxu0 0.0
      %919 = vmatpush2.msra.mxu0 0.0
      %920 = vmatprep.subr.mxu0 0.0
      %921 = vmatpush2.msra.mxu0 0.0
      %922 = vmatprep.mubr.f32.mxu0 0.0
      %923 = vmatmul.mubr.f32.gmra.mxu0 %v856
      %v924 = vpop.f32.mrf.mxu0
      %v925 = vadd.f32 %v731, %v924
      %v926 = vpop.f32.mrf.mxu0
      %v927 = vadd.f32 %v733, %v926
      %928 = vdwg.mxu0
      %s929 = scalar_lea.vmem %s3, 32
      %v930 = vld [vmem:[%s929] sm:$0xff]
      %v931 = vld [vmem:[%s929 + $0x8] sm:$0xff]
      %v932 = vld [vmem:[%s929 + $0x10] sm:$0xff]
      %v933 = vld [vmem:[%s929 + $0x18] sm:$0xff]
      %934 = vrot.lane.b32.xlu0 %v925, 17
      %v935 = vpop.permute.xlu0 %934
      %936 = vrot.lane.b32.xlu0 %v927, 17
      %v937 = vpop.permute.xlu0 %936
      %v938 = vsel %vm330, %v935, %v937
      %v939 = vsel %vm330, %v937, %v935
      %v940 = vld [vmem:[%s4] sm:$0xff]
      %v941 = vld [vmem:[%s4 + $0x8] sm:$0xff]
      %v942 = vmul.f32 %v939, %v940
      %v943 = vmul.f32 %v938, %v941
      %944 = vst [vmem:[#allocation2] sm:$0xff] %v942
      %945 = vst [vmem:[#allocation2 + $0x8] sm:$0xff] %v943
      %946 = vrot.lane.b32.xlu0 %v925, 16
      %v947 = vpop.permute.xlu0 %946
      %948 = vrot.lane.b32.xlu0 %v927, 16
      %v949 = vpop.permute.xlu0 %948
      %v950 = vsel %vm343, %v947, %v949
      %v951 = vsel %vm343, %v949, %v947
      %v952 = vld [vmem:[%s346] sm:$0xff]
      %v953 = vld [vmem:[%s346 + $0x8] sm:$0xff]
      %v954 = vmul.f32 %v951, %v952
      %v955 = vmul.f32 %v950, %v953
      %956 = vst [vmem:[#allocation2 + $0x10] sm:$0xff] %v954
      %957 = vst [vmem:[#allocation2 + $0x18] sm:$0xff] %v955
      %958 = vrot.lane.b32.xlu0 %v925, 15
      %v959 = vpop.permute.xlu0 %958
      %960 = vrot.lane.b32.xlu0 %v927, 15
      %v961 = vpop.permute.xlu0 %960
      %v962 = vsel %vm357, %v959, %v961
      %v963 = vsel %vm357, %v961, %v959
      %v964 = vld [vmem:[%s360] sm:$0xff]
      %v965 = vld [vmem:[%s360 + $0x8] sm:$0xff]
      %v966 = vmul.f32 %v963, %v964
      %v967 = vmul.f32 %v962, %v965
      %968 = vst [vmem:[#allocation2 + $0x20] sm:$0xff] %v966
      %969 = vst [vmem:[#allocation2 + $0x28] sm:$0xff] %v967
      %970 = vrot.lane.b32.xlu0 %v925, 1
      %v971 = vpop.permute.xlu0 %970
      %972 = vrot.lane.b32.xlu0 %v927, 1
      %v973 = vpop.permute.xlu0 %972
      %v974 = vsel %vm371, %v971, %v973
      %v975 = vsel %vm371, %v973, %v971
      %v976 = vld [vmem:[%s374] sm:$0xff]
      %v977 = vld [vmem:[%s374 + $0x8] sm:$0xff]
      %v978 = vmul.f32 %v975, %v976
      %v979 = vmul.f32 %v974, %v977
      %980 = vst [vmem:[#allocation2 + $0x30] sm:$0xff] %v978
      %981 = vst [vmem:[#allocation2 + $0x38] sm:$0xff] %v979
      %982 = vst [vmem:[#allocation2 + $0x40] sm:$0xff] %v925
      %983 = vst [vmem:[#allocation2 + $0x48] sm:$0xff] %v927
      %984 = vrot.lane.b32.xlu0 %v925, 127
      %v985 = vpop.permute.xlu0 %984
      %986 = vrot.lane.b32.xlu0 %v927, 127
      %v987 = vpop.permute.xlu0 %986
      %v988 = vsel %vm387, %v985, %v987
      %v989 = vsel %vm387, %v987, %v985
      %v990 = vld [vmem:[%s390] sm:$0xff]
      %v991 = vld [vmem:[%s390 + $0x8] sm:$0xff]
      %v992 = vmul.f32 %v988, %v990
      %v993 = vmul.f32 %v989, %v991
      %994 = vst [vmem:[#allocation2 + $0x50] sm:$0xff] %v992
      %995 = vst [vmem:[#allocation2 + $0x58] sm:$0xff] %v993
      %996 = vrot.lane.b32.xlu0 %v925, 113
      %v997 = vpop.permute.xlu0 %996
      %998 = vrot.lane.b32.xlu0 %v927, 113
      %v999 = vpop.permute.xlu0 %998
      %v1000 = vsel %vm401, %v997, %v999
      %v1001 = vsel %vm401, %v999, %v997
      %v1002 = vld [vmem:[%s404] sm:$0xff]
      %v1003 = vld [vmem:[%s404 + $0x8] sm:$0xff]
      %v1004 = vmul.f32 %v1000, %v1002
      %v1005 = vmul.f32 %v1001, %v1003
      %1006 = vst [vmem:[#allocation2 + $0x60] sm:$0xff] %v1004
      %1007 = vst [vmem:[#allocation2 + $0x68] sm:$0xff] %v1005
      %1008 = vrot.lane.b32.xlu0 %v925, 112
      %v1009 = vpop.permute.xlu0 %1008
      %1010 = vrot.lane.b32.xlu0 %v927, 112
      %v1011 = vpop.permute.xlu0 %1010
      %v1012 = vsel %vm415, %v1009, %v1011
      %v1013 = vsel %vm415, %v1011, %v1009
      %v1014 = vld [vmem:[%s418] sm:$0xff]
      %v1015 = vld [vmem:[%s418 + $0x8] sm:$0xff]
      %v1016 = vmul.f32 %v1012, %v1014
      %v1017 = vmul.f32 %v1013, %v1015
      %1018 = vst [vmem:[#allocation2 + $0x70] sm:$0xff] %v1016
      %1019 = vst [vmem:[#allocation2 + $0x78] sm:$0xff] %v1017
      %1020 = vrot.lane.b32.xlu0 %v925, 111
      %v1021 = vpop.permute.xlu0 %1020
      %1022 = vrot.lane.b32.xlu0 %v927, 111
      %v1023 = vpop.permute.xlu0 %1022
      %v1024 = vsel %vm429, %v1021, %v1023
      %v1025 = vsel %vm429, %v1023, %v1021
      %v1026 = vld [vmem:[%s432] sm:$0xff]
      %v1027 = vld [vmem:[%s432 + $0x8] sm:$0xff]
      %v1028 = vmul.f32 %v1024, %v1026
      %v1029 = vmul.f32 %v1025, %v1027
      %1030 = vst [vmem:[#allocation2 + $0x80] sm:$0xff] %v1028
      %1031 = vst [vmem:[#allocation2 + $0x88] sm:$0xff] %v1029
      %v1032 = vld [vmem:[#allocation2] sm:$0xff]
      %v1033 = vld [vmem:[#allocation2 + $0x8] sm:$0xff]
      %v1034 = vld [vmem:[#allocation2 + $0x10] sm:$0xff]
      %v1035 = vld [vmem:[#allocation2 + $0x18] sm:$0xff]
      %v1036 = vld [vmem:[#allocation2 + $0x20] sm:$0xff]
      %v1037 = vld [vmem:[#allocation2 + $0x28] sm:$0xff]
      %v1038 = vld [vmem:[#allocation2 + $0x30] sm:$0xff]
      %v1039 = vld [vmem:[#allocation2 + $0x38] sm:$0xff]
      %v1040 = vld [vmem:[#allocation2 + $0x40] sm:$0xff]
      %v1041 = vld [vmem:[#allocation2 + $0x48] sm:$0xff]
      %v1042 = vld [vmem:[#allocation2 + $0x50] sm:$0xff]
      %v1043 = vld [vmem:[#allocation2 + $0x58] sm:$0xff]
      %v1044 = vld [vmem:[#allocation2 + $0x60] sm:$0xff]
      %v1045 = vld [vmem:[#allocation2 + $0x68] sm:$0xff]
      %v1046 = vld [vmem:[#allocation2 + $0x70] sm:$0xff]
      %v1047 = vld [vmem:[#allocation2 + $0x78] sm:$0xff]
      %v1048 = vld [vmem:[#allocation2 + $0x80] sm:$0xff]
      %v1049 = vld [vmem:[#allocation2 + $0x88] sm:$0xff]
      %v1050 = vld [vmem:[#allocation2 + $0x90] sm:$0xff]
      %v1051 = vld [vmem:[#allocation2 + $0x98] sm:$0xff]
      %v1053 = vsel %vm459, %v930, 0
      %1055 = vmatprep.subr.mxu0 0.0
      %1056 = vmatpush1.msra.mxu0 0.0
      %1057 = vmatprep.subr.mxu0 0.0
      %1058 = vmatpush1.msra.mxu0 0.0
      %1059 = vmatprep.subr.mxu0 0.0
      %1060 = vmatpush1.msra.mxu0 0.0
      %1061 = vmatprep.subr.mxu0 0.0
      %1062 = vmatpush1.msra.mxu0 0.0
      %1063 = vmatprep.subr.mxu0 0.0
      %1064 = vmatpush1.msra.mxu0 0.0
      %1065 = vmatprep.subr.mxu0 0.0
      %1066 = vmatpush1.msra.mxu0 0.0
      %1067 = vmatprep.subr.mxu0 %v1051
      %1068 = vmatpush1.msra.mxu0 %v1050
      %1069 = vmatprep.subr.mxu0 %v1049
      %1070 = vmatpush1.msra.mxu0 %v1048
      %1071 = vmatprep.subr.mxu0 %v1047
      %1072 = vmatpush1.msra.mxu0 %v1046
      %1073 = vmatprep.subr.mxu0 %v1045
      %1074 = vmatpush1.msra.mxu0 %v1044
      %1075 = vmatprep.subr.mxu0 %v1043
      %1076 = vmatpush1.msra.mxu0 %v1042
      %1077 = vmatprep.subr.mxu0 %v1041
      %1078 = vmatpush1.msra.mxu0 %v1040
      %1079 = vmatprep.subr.mxu0 %v1039
      %1080 = vmatpush1.msra.mxu0 %v1038
      %1081 = vmatprep.subr.mxu0 %v1037
      %1082 = vmatpush1.msra.mxu0 %v1036
      %1083 = vmatprep.subr.mxu0 %v1035
      %1084 = vmatpush1.msra.mxu0 %v1034
      %1085 = vmatprep.subr.mxu0 %v1033
      %1086 = vmatpush1.msra.mxu0 %v1032
      %1087 = vmatprep.subr.mxu0 0.0
      %1088 = vmatpush2.msra.mxu0 0.0
      %1089 = vmatprep.subr.mxu0 0.0
      %1090 = vmatpush2.msra.mxu0 0.0
      %1091 = vmatprep.subr.mxu0 0.0
      %1092 = vmatpush2.msra.mxu0 0.0
      %1093 = vmatprep.subr.mxu0 0.0
      %1094 = vmatpush2.msra.mxu0 0.0
      %1095 = vmatprep.subr.mxu0 0.0
      %1096 = vmatpush2.msra.mxu0 0.0
      %1097 = vmatprep.subr.mxu0 0.0
      %1098 = vmatpush2.msra.mxu0 0.0
      %1099 = vmatprep.subr.mxu0 0.0
      %1100 = vmatpush2.msra.mxu0 0.0
      %1101 = vmatprep.subr.mxu0 0.0
      %1102 = vmatpush2.msra.mxu0 0.0
      %1103 = vmatprep.subr.mxu0 0.0
      %1104 = vmatpush2.msra.mxu0 0.0
      %1105 = vmatprep.subr.mxu0 0.0
      %1106 = vmatpush2.msra.mxu0 0.0
      %1107 = vmatprep.subr.mxu0 0.0
      %1108 = vmatpush2.msra.mxu0 0.0
      %1109 = vmatprep.subr.mxu0 0.0
      %1110 = vmatpush2.msra.mxu0 0.0
      %1111 = vmatprep.subr.mxu0 0.0
      %1112 = vmatpush2.msra.mxu0 0.0
      %1113 = vmatprep.subr.mxu0 0.0
      %1114 = vmatpush2.msra.mxu0 0.0
      %1115 = vmatprep.subr.mxu0 0.0
      %1116 = vmatpush2.msra.mxu0 0.0
      %1117 = vmatprep.subr.mxu0 0.0
      %1118 = vmatpush2.msra.mxu0 0.0
      %1119 = vmatprep.mubr.f32.mxu0 0.0
      %1120 = vmatmul.mubr.f32.gmra.mxu0 %v1053
      %v1121 = vpop.f32.mrf.mxu0
      %v1122 = vadd.f32 0.0, %v1121
      %v1123 = vpop.f32.mrf.mxu0
      %v1124 = vadd.f32 0.0, %v1123
      %1125 = vdwg.mxu0
      %1126 = vrot.lane.b32.xlu0 %v1122, 17
      %v1127 = vpop.permute.xlu0 %1126
      %1128 = vrot.lane.b32.xlu0 %v1124, 17
      %v1129 = vpop.permute.xlu0 %1128
      %v1130 = vsel %vm330, %v1127, %v1129
      %v1131 = vsel %vm330, %v1129, %v1127
      %v1132 = vld [vmem:[%s4] sm:$0xff]
      %v1133 = vld [vmem:[%s4 + $0x8] sm:$0xff]
      %v1134 = vmul.f32 %v1131, %v1132
      %v1135 = vmul.f32 %v1130, %v1133
      %1136 = vst [vmem:[#allocation2] sm:$0xff] %v1134
      %1137 = vst [vmem:[#allocation2 + $0x8] sm:$0xff] %v1135
      %1138 = vrot.lane.b32.xlu0 %v1122, 16
      %v1139 = vpop.permute.xlu0 %1138
      %1140 = vrot.lane.b32.xlu0 %v1124, 16
      %v1141 = vpop.permute.xlu0 %1140
      %v1142 = vsel %vm343, %v1139, %v1141
      %v1143 = vsel %vm343, %v1141, %v1139
      %v1144 = vld [vmem:[%s346] sm:$0xff]
      %v1145 = vld [vmem:[%s346 + $0x8] sm:$0xff]
      %v1146 = vmul.f32 %v1143, %v1144
      %v1147 = vmul.f32 %v1142, %v1145
      %1148 = vst [vmem:[#allocation2 + $0x10] sm:$0xff] %v1146
      %1149 = vst [vmem:[#allocation2 + $0x18] sm:$0xff] %v1147
      %1150 = vrot.lane.b32.xlu0 %v1122, 15
      %v1151 = vpop.permute.xlu0 %1150
      %1152 = vrot.lane.b32.xlu0 %v1124, 15
      %v1153 = vpop.permute.xlu0 %1152
      %v1154 = vsel %vm357, %v1151, %v1153
      %v1155 = vsel %vm357, %v1153, %v1151
      %v1156 = vld [vmem:[%s360] sm:$0xff]
      %v1157 = vld [vmem:[%s360 + $0x8] sm:$0xff]
      %v1158 = vmul.f32 %v1155, %v1156
      %v1159 = vmul.f32 %v1154, %v1157
      %1160 = vst [vmem:[#allocation2 + $0x20] sm:$0xff] %v1158
      %1161 = vst [vmem:[#allocation2 + $0x28] sm:$0xff] %v1159
      %1162 = vrot.lane.b32.xlu0 %v1122, 1
      %v1163 = vpop.permute.xlu0 %1162
      %1164 = vrot.lane.b32.xlu0 %v1124, 1
      %v1165 = vpop.permute.xlu0 %1164
      %v1166 = vsel %vm371, %v1163, %v1165
      %v1167 = vsel %vm371, %v1165, %v1163
      %v1168 = vld [vmem:[%s374] sm:$0xff]
      %v1169 = vld [vmem:[%s374 + $0x8] sm:$0xff]
      %v1170 = vmul.f32 %v1167, %v1168
      %v1171 = vmul.f32 %v1166, %v1169
      %1172 = vst [vmem:[#allocation2 + $0x30] sm:$0xff] %v1170
      %1173 = vst [vmem:[#allocation2 + $0x38] sm:$0xff] %v1171
      %1174 = vst [vmem:[#allocation2 + $0x40] sm:$0xff] %v1122
      %1175 = vst [vmem:[#allocation2 + $0x48] sm:$0xff] %v1124
      %1176 = vrot.lane.b32.xlu0 %v1122, 127
      %v1177 = vpop.permute.xlu0 %1176
      %1178 = vrot.lane.b32.xlu0 %v1124, 127
      %v1179 = vpop.permute.xlu0 %1178
      %v1180 = vsel %vm387, %v1177, %v1179
      %v1181 = vsel %vm387, %v1179, %v1177
      %v1182 = vld [vmem:[%s390] sm:$0xff]
      %v1183 = vld [vmem:[%s390 + $0x8] sm:$0xff]
      %v1184 = vmul.f32 %v1180, %v1182
      %v1185 = vmul.f32 %v1181, %v1183
      %1186 = vst [vmem:[#allocation2 + $0x50] sm:$0xff] %v1184
      %1187 = vst [vmem:[#allocation2 + $0x58] sm:$0xff] %v1185
      %1188 = vrot.lane.b32.xlu0 %v1122, 113
      %v1189 = vpop.permute.xlu0 %1188
      %1190 = vrot.lane.b32.xlu0 %v1124, 113
      %v1191 = vpop.permute.xlu0 %1190
      %v1192 = vsel %vm401, %v1189, %v1191
      %v1193 = vsel %vm401, %v1191, %v1189
      %v1194 = vld [vmem:[%s404] sm:$0xff]
      %v1195 = vld [vmem:[%s404 + $0x8] sm:$0xff]
      %v1196 = vmul.f32 %v1192, %v1194
      %v1197 = vmul.f32 %v1193, %v1195
      %1198 = vst [vmem:[#allocation2 + $0x60] sm:$0xff] %v1196
      %1199 = vst [vmem:[#allocation2 + $0x68] sm:$0xff] %v1197
      %1200 = vrot.lane.b32.xlu0 %v1122, 112
      %v1201 = vpop.permute.xlu0 %1200
      %1202 = vrot.lane.b32.xlu0 %v1124, 112
      %v1203 = vpop.permute.xlu0 %1202
      %v1204 = vsel %vm415, %v1201, %v1203
      %v1205 = vsel %vm415, %v1203, %v1201
      %v1206 = vld [vmem:[%s418] sm:$0xff]
      %v1207 = vld [vmem:[%s418 + $0x8] sm:$0xff]
      %v1208 = vmul.f32 %v1204, %v1206
      %v1209 = vmul.f32 %v1205, %v1207
      %1210 = vst [vmem:[#allocation2 + $0x70] sm:$0xff] %v1208
      %1211 = vst [vmem:[#allocation2 + $0x78] sm:$0xff] %v1209
      %1212 = vrot.lane.b32.xlu0 %v1122, 111
      %v1213 = vpop.permute.xlu0 %1212
      %1214 = vrot.lane.b32.xlu0 %v1124, 111
      %v1215 = vpop.permute.xlu0 %1214
      %v1216 = vsel %vm429, %v1213, %v1215
      %v1217 = vsel %vm429, %v1215, %v1213
      %v1218 = vld [vmem:[%s432] sm:$0xff]
      %v1219 = vld [vmem:[%s432 + $0x8] sm:$0xff]
      %v1220 = vmul.f32 %v1216, %v1218
      %v1221 = vmul.f32 %v1217, %v1219
      %1222 = vst [vmem:[#allocation2 + $0x80] sm:$0xff] %v1220
      %1223 = vst [vmem:[#allocation2 + $0x88] sm:$0xff] %v1221
      %v1224 = vld [vmem:[#allocation2] sm:$0xff]
      %v1225 = vld [vmem:[#allocation2 + $0x8] sm:$0xff]
      %v1226 = vld [vmem:[#allocation2 + $0x10] sm:$0xff]
      %v1227 = vld [vmem:[#allocation2 + $0x18] sm:$0xff]
      %v1228 = vld [vmem:[#allocation2 + $0x20] sm:$0xff]
      %v1229 = vld [vmem:[#allocation2 + $0x28] sm:$0xff]
      %v1230 = vld [vmem:[#allocation2 + $0x30] sm:$0xff]
      %v1231 = vld [vmem:[#allocation2 + $0x38] sm:$0xff]
      %v1232 = vld [vmem:[#allocation2 + $0x40] sm:$0xff]
      %v1233 = vld [vmem:[#allocation2 + $0x48] sm:$0xff]
      %v1234 = vld [vmem:[#allocation2 + $0x50] sm:$0xff]
      %v1235 = vld [vmem:[#allocation2 + $0x58] sm:$0xff]
      %v1236 = vld [vmem:[#allocation2 + $0x60] sm:$0xff]
      %v1237 = vld [vmem:[#allocation2 + $0x68] sm:$0xff]
      %v1238 = vld [vmem:[#allocation2 + $0x70] sm:$0xff]
      %v1239 = vld [vmem:[#allocation2 + $0x78] sm:$0xff]
      %v1240 = vld [vmem:[#allocation2 + $0x80] sm:$0xff]
      %v1241 = vld [vmem:[#allocation2 + $0x88] sm:$0xff]
      %v1242 = vld [vmem:[#allocation2 + $0x90] sm:$0xff]
      %v1243 = vld [vmem:[#allocation2 + $0x98] sm:$0xff]
      %v1245 = vsel %vm459, %v931, 0
      %v1248 = vsel %vm459, %v932, 0
      %1250 = vmatprep.subr.mxu0 0.0
      %1251 = vmatpush1.msra.mxu0 0.0
      %1252 = vmatprep.subr.mxu0 0.0
      %1253 = vmatpush1.msra.mxu0 0.0
      %1254 = vmatprep.subr.mxu0 0.0
      %1255 = vmatpush1.msra.mxu0 0.0
      %1256 = vmatprep.subr.mxu0 0.0
      %1257 = vmatpush1.msra.mxu0 0.0
      %1258 = vmatprep.subr.mxu0 0.0
      %1259 = vmatpush1.msra.mxu0 0.0
      %1260 = vmatprep.subr.mxu0 0.0
      %1261 = vmatpush1.msra.mxu0 0.0
      %1262 = vmatprep.subr.mxu0 %v1243
      %1263 = vmatpush1.msra.mxu0 %v1242
      %1264 = vmatprep.subr.mxu0 %v1241
      %1265 = vmatpush1.msra.mxu0 %v1240
      %1266 = vmatprep.subr.mxu0 %v1239
      %1267 = vmatpush1.msra.mxu0 %v1238
      %1268 = vmatprep.subr.mxu0 %v1237
      %1269 = vmatpush1.msra.mxu0 %v1236
      %1270 = vmatprep.subr.mxu0 %v1235
      %1271 = vmatpush1.msra.mxu0 %v1234
      %1272 = vmatprep.subr.mxu0 %v1233
      %1273 = vmatpush1.msra.mxu0 %v1232
      %1274 = vmatprep.subr.mxu0 %v1231
      %1275 = vmatpush1.msra.mxu0 %v1230
      %1276 = vmatprep.subr.mxu0 %v1229
      %1277 = vmatpush1.msra.mxu0 %v1228
      %1278 = vmatprep.subr.mxu0 %v1227
      %1279 = vmatpush1.msra.mxu0 %v1226
      %1280 = vmatprep.subr.mxu0 %v1225
      %1281 = vmatpush1.msra.mxu0 %v1224
      %1282 = vmatprep.subr.mxu0 0.0
      %1283 = vmatpush2.msra.mxu0 0.0
      %1284 = vmatprep.subr.mxu0 0.0
      %1285 = vmatpush2.msra.mxu0 0.0
      %1286 = vmatprep.subr.mxu0 0.0
      %1287 = vmatpush2.msra.mxu0 0.0
      %1288 = vmatprep.subr.mxu0 0.0
      %1289 = vmatpush2.msra.mxu0 0.0
      %1290 = vmatprep.subr.mxu0 0.0
      %1291 = vmatpush2.msra.mxu0 0.0
      %1292 = vmatprep.subr.mxu0 0.0
      %1293 = vmatpush2.msra.mxu0 0.0
      %1294 = vmatprep.subr.mxu0 0.0
      %1295 = vmatpush2.msra.mxu0 0.0
      %1296 = vmatprep.subr.mxu0 0.0
      %1297 = vmatpush2.msra.mxu0 0.0
      %1298 = vmatprep.subr.mxu0 0.0
      %1299 = vmatpush2.msra.mxu0 0.0
      %1300 = vmatprep.subr.mxu0 0.0
      %1301 = vmatpush2.msra.mxu0 0.0
      %1302 = vmatprep.subr.mxu0 0.0
      %1303 = vmatpush2.msra.mxu0 0.0
      %1304 = vmatprep.subr.mxu0 0.0
      %1305 = vmatpush2.msra.mxu0 0.0
      %1306 = vmatprep.subr.mxu0 0.0
      %1307 = vmatpush2.msra.mxu0 0.0
      %1308 = vmatprep.subr.mxu0 0.0
      %1309 = vmatpush2.msra.mxu0 0.0
      %1310 = vmatprep.subr.mxu0 0.0
      %1311 = vmatpush2.msra.mxu0 0.0
      %1312 = vmatprep.subr.mxu0 0.0
      %1313 = vmatpush2.msra.mxu0 0.0
      %1314 = vmatprep.mubr.f32.mxu0 0.0
      %1315 = vmatmul.mubr.f32.gmra.mxu0 %v1245
      %v1316 = vpop.f32.mrf.mxu0
      %v1317 = vadd.f32 0.0, %v1316
      %v1318 = vpop.f32.mrf.mxu0
      %v1319 = vadd.f32 0.0, %v1318
      %1320 = vmatprep.mubr.f32.mxu0 0.0
      %1321 = vmatmul.mubr.f32.gmra.mxu0 %v1248
      %v1322 = vpop.f32.mrf.mxu0
      %v1323 = vadd.f32 0.0, %v1322
      %v1324 = vpop.f32.mrf.mxu0
      %v1325 = vadd.f32 0.0, %v1324
      %1326 = vdwg.mxu0
      %v1327 = vmax.f32 %v1317, 0.0
      %v1328 = vmax.f32 %v1319, 0.0
      %1329 = vrot.lane.b32.xlu0 %v1327, 17
      %v1330 = vpop.permute.xlu0 %1329
      %1331 = vrot.lane.b32.xlu0 %v1328, 17
      %v1332 = vpop.permute.xlu0 %1331
      %v1333 = vsel %vm330, %v1330, %v1332
      %v1334 = vsel %vm330, %v1332, %v1330
      %v1335 = vld [vmem:[%s4] sm:$0xff]
      %v1336 = vld [vmem:[%s4 + $0x8] sm:$0xff]
      %v1337 = vmul.f32 %v1334, %v1335
      %v1338 = vmul.f32 %v1333, %v1336
      %1339 = vst [vmem:[#allocation2] sm:$0xff] %v1337
      %1340 = vst [vmem:[#allocation2 + $0x8] sm:$0xff] %v1338
      %1341 = vrot.lane.b32.xlu0 %v1327, 16
      %v1342 = vpop.permute.xlu0 %1341
      %1343 = vrot.lane.b32.xlu0 %v1328, 16
      %v1344 = vpop.permute.xlu0 %1343
      %v1345 = vsel %vm343, %v1342, %v1344
      %v1346 = vsel %vm343, %v1344, %v1342
      %v1347 = vld [vmem:[%s346] sm:$0xff]
      %v1348 = vld [vmem:[%s346 + $0x8] sm:$0xff]
      %v1349 = vmul.f32 %v1346, %v1347
      %v1350 = vmul.f32 %v1345, %v1348
      %1351 = vst [vmem:[#allocation2 + $0x10] sm:$0xff] %v1349
      %1352 = vst [vmem:[#allocation2 + $0x18] sm:$0xff] %v1350
      %1353 = vrot.lane.b32.xlu0 %v1327, 15
      %v1354 = vpop.permute.xlu0 %1353
      %1355 = vrot.lane.b32.xlu0 %v1328, 15
      %v1356 = vpop.permute.xlu0 %1355
      %v1357 = vsel %vm357, %v1354, %v1356
      %v1358 = vsel %vm357, %v1356, %v1354
      %v1359 = vld [vmem:[%s360] sm:$0xff]
      %v1360 = vld [vmem:[%s360 + $0x8] sm:$0xff]
      %v1361 = vmul.f32 %v1358, %v1359
      %v1362 = vmul.f32 %v1357, %v1360
      %1363 = vst [vmem:[#allocation2 + $0x20] sm:$0xff] %v1361
      %1364 = vst [vmem:[#allocation2 + $0x28] sm:$0xff] %v1362
      %1365 = vrot.lane.b32.xlu0 %v1327, 1
      %v1366 = vpop.permute.xlu0 %1365
      %1367 = vrot.lane.b32.xlu0 %v1328, 1
      %v1368 = vpop.permute.xlu0 %1367
      %v1369 = vsel %vm371, %v1366, %v1368
      %v1370 = vsel %vm371, %v1368, %v1366
      %v1371 = vld [vmem:[%s374] sm:$0xff]
      %v1372 = vld [vmem:[%s374 + $0x8] sm:$0xff]
      %v1373 = vmul.f32 %v1370, %v1371
      %v1374 = vmul.f32 %v1369, %v1372
      %1375 = vst [vmem:[#allocation2 + $0x30] sm:$0xff] %v1373
      %1376 = vst [vmem:[#allocation2 + $0x38] sm:$0xff] %v1374
      %1377 = vst [vmem:[#allocation2 + $0x40] sm:$0xff] %v1327
      %1378 = vst [vmem:[#allocation2 + $0x48] sm:$0xff] %v1328
      %1379 = vrot.lane.b32.xlu0 %v1327, 127
      %v1380 = vpop.permute.xlu0 %1379
      %1381 = vrot.lane.b32.xlu0 %v1328, 127
      %v1382 = vpop.permute.xlu0 %1381
      %v1383 = vsel %vm387, %v1380, %v1382
      %v1384 = vsel %vm387, %v1382, %v1380
      %v1385 = vld [vmem:[%s390] sm:$0xff]
      %v1386 = vld [vmem:[%s390 + $0x8] sm:$0xff]
      %v1387 = vmul.f32 %v1383, %v1385
      %v1388 = vmul.f32 %v1384, %v1386
      %1389 = vst [vmem:[#allocation2 + $0x50] sm:$0xff] %v1387
      %1390 = vst [vmem:[#allocation2 + $0x58] sm:$0xff] %v1388
      %1391 = vrot.lane.b32.xlu0 %v1327, 113
      %v1392 = vpop.permute.xlu0 %1391
      %1393 = vrot.lane.b32.xlu0 %v1328, 113
      %v1394 = vpop.permute.xlu0 %1393
      %v1395 = vsel %vm401, %v1392, %v1394
      %v1396 = vsel %vm401, %v1394, %v1392
      %v1397 = vld [vmem:[%s404] sm:$0xff]
      %v1398 = vld [vmem:[%s404 + $0x8] sm:$0xff]
      %v1399 = vmul.f32 %v1395, %v1397
      %v1400 = vmul.f32 %v1396, %v1398
      %1401 = vst [vmem:[#allocation2 + $0x60] sm:$0xff] %v1399
      %1402 = vst [vmem:[#allocation2 + $0x68] sm:$0xff] %v1400
      %1403 = vrot.lane.b32.xlu0 %v1327, 112
      %v1404 = vpop.permute.xlu0 %1403
      %1405 = vrot.lane.b32.xlu0 %v1328, 112
      %v1406 = vpop.permute.xlu0 %1405
      %v1407 = vsel %vm415, %v1404, %v1406
      %v1408 = vsel %vm415, %v1406, %v1404
      %v1409 = vld [vmem:[%s418] sm:$0xff]
      %v1410 = vld [vmem:[%s418 + $0x8] sm:$0xff]
      %v1411 = vmul.f32 %v1407, %v1409
      %v1412 = vmul.f32 %v1408, %v1410
      %1413 = vst [vmem:[#allocation2 + $0x70] sm:$0xff] %v1411
      %1414 = vst [vmem:[#allocation2 + $0x78] sm:$0xff] %v1412
      %1415 = vrot.lane.b32.xlu0 %v1327, 111
      %v1416 = vpop.permute.xlu0 %1415
      %1417 = vrot.lane.b32.xlu0 %v1328, 111
      %v1418 = vpop.permute.xlu0 %1417
      %v1419 = vsel %vm429, %v1416, %v1418
      %v1420 = vsel %vm429, %v1418, %v1416
      %v1421 = vld [vmem:[%s432] sm:$0xff]
      %v1422 = vld [vmem:[%s432 + $0x8] sm:$0xff]
      %v1423 = vmul.f32 %v1419, %v1421
      %v1424 = vmul.f32 %v1420, %v1422
      %1425 = vst [vmem:[#allocation2 + $0x80] sm:$0xff] %v1423
      %1426 = vst [vmem:[#allocation2 + $0x88] sm:$0xff] %v1424
      %v1427 = vld [vmem:[#allocation2] sm:$0xff]
      %v1428 = vld [vmem:[#allocation2 + $0x8] sm:$0xff]
      %v1429 = vld [vmem:[#allocation2 + $0x10] sm:$0xff]
      %v1430 = vld [vmem:[#allocation2 + $0x18] sm:$0xff]
      %v1431 = vld [vmem:[#allocation2 + $0x20] sm:$0xff]
      %v1432 = vld [vmem:[#allocation2 + $0x28] sm:$0xff]
      %v1433 = vld [vmem:[#allocation2 + $0x30] sm:$0xff]
      %v1434 = vld [vmem:[#allocation2 + $0x38] sm:$0xff]
      %v1435 = vld [vmem:[#allocation2 + $0x40] sm:$0xff]
      %v1436 = vld [vmem:[#allocation2 + $0x48] sm:$0xff]
      %v1437 = vld [vmem:[#allocation2 + $0x50] sm:$0xff]
      %v1438 = vld [vmem:[#allocation2 + $0x58] sm:$0xff]
      %v1439 = vld [vmem:[#allocation2 + $0x60] sm:$0xff]
      %v1440 = vld [vmem:[#allocation2 + $0x68] sm:$0xff]
      %v1441 = vld [vmem:[#allocation2 + $0x70] sm:$0xff]
      %v1442 = vld [vmem:[#allocation2 + $0x78] sm:$0xff]
      %v1443 = vld [vmem:[#allocation2 + $0x80] sm:$0xff]
      %v1444 = vld [vmem:[#allocation2 + $0x88] sm:$0xff]
      %v1445 = vld [vmem:[#allocation2 + $0x90] sm:$0xff]
      %v1446 = vld [vmem:[#allocation2 + $0x98] sm:$0xff]
      %v1448 = vsel %vm459, %v933, 0
      %1450 = vmatprep.subr.mxu0 0.0
      %1451 = vmatpush1.msra.mxu0 0.0
      %1452 = vmatprep.subr.mxu0 0.0
      %1453 = vmatpush1.msra.mxu0 0.0
      %1454 = vmatprep.subr.mxu0 0.0
      %1455 = vmatpush1.msra.mxu0 0.0
      %1456 = vmatprep.subr.mxu0 0.0
      %1457 = vmatpush1.msra.mxu0 0.0
      %1458 = vmatprep.subr.mxu0 0.0
      %1459 = vmatpush1.msra.mxu0 0.0
      %1460 = vmatprep.subr.mxu0 0.0
      %1461 = vmatpush1.msra.mxu0 0.0
      %1462 = vmatprep.subr.mxu0 %v1446
      %1463 = vmatpush1.msra.mxu0 %v1445
      %1464 = vmatprep.subr.mxu0 %v1444
      %1465 = vmatpush1.msra.mxu0 %v1443
      %1466 = vmatprep.subr.mxu0 %v1442
      %1467 = vmatpush1.msra.mxu0 %v1441
      %1468 = vmatprep.subr.mxu0 %v1440
      %1469 = vmatpush1.msra.mxu0 %v1439
      %1470 = vmatprep.subr.mxu0 %v1438
      %1471 = vmatpush1.msra.mxu0 %v1437
      %1472 = vmatprep.subr.mxu0 %v1436
      %1473 = vmatpush1.msra.mxu0 %v1435
      %1474 = vmatprep.subr.mxu0 %v1434
      %1475 = vmatpush1.msra.mxu0 %v1433
      %1476 = vmatprep.subr.mxu0 %v1432
      %1477 = vmatpush1.msra.mxu0 %v1431
      %1478 = vmatprep.subr.mxu0 %v1430
      %1479 = vmatpush1.msra.mxu0 %v1429
      %1480 = vmatprep.subr.mxu0 %v1428
      %1481 = vmatpush1.msra.mxu0 %v1427
      %1482 = vmatprep.subr.mxu0 0.0
      %1483 = vmatpush2.msra.mxu0 0.0
      %1484 = vmatprep.subr.mxu0 0.0
      %1485 = vmatpush2.msra.mxu0 0.0
      %1486 = vmatprep.subr.mxu0 0.0
      %1487 = vmatpush2.msra.mxu0 0.0
      %1488 = vmatprep.subr.mxu0 0.0
      %1489 = vmatpush2.msra.mxu0 0.0
      %1490 = vmatprep.subr.mxu0 0.0
      %1491 = vmatpush2.msra.mxu0 0.0
      %1492 = vmatprep.subr.mxu0 0.0
      %1493 = vmatpush2.msra.mxu0 0.0
      %1494 = vmatprep.subr.mxu0 0.0
      %1495 = vmatpush2.msra.mxu0 0.0
      %1496 = vmatprep.subr.mxu0 0.0
      %1497 = vmatpush2.msra.mxu0 0.0
      %1498 = vmatprep.subr.mxu0 0.0
      %1499 = vmatpush2.msra.mxu0 0.0
      %1500 = vmatprep.subr.mxu0 0.0
      %1501 = vmatpush2.msra.mxu0 0.0
      %1502 = vmatprep.subr.mxu0 0.0
      %1503 = vmatpush2.msra.mxu0 0.0
      %1504 = vmatprep.subr.mxu0 0.0
      %1505 = vmatpush2.msra.mxu0 0.0
      %1506 = vmatprep.subr.mxu0 0.0
      %1507 = vmatpush2.msra.mxu0 0.0
      %1508 = vmatprep.subr.mxu0 0.0
      %1509 = vmatpush2.msra.mxu0 0.0
      %1510 = vmatprep.subr.mxu0 0.0
      %1511 = vmatpush2.msra.mxu0 0.0
      %1512 = vmatprep.subr.mxu0 0.0
      %1513 = vmatpush2.msra.mxu0 0.0
      %1514 = vmatprep.mubr.f32.mxu0 0.0
      %1515 = vmatmul.mubr.f32.gmra.mxu0 %v1448
      %v1516 = vpop.f32.mrf.mxu0
      %v1517 = vadd.f32 %v1323, %v1516
      %v1518 = vpop.f32.mrf.mxu0
      %v1519 = vadd.f32 %v1325, %v1518
      %1520 = vdwg.mxu0
      %1521 = vst [vmem:[%s226] sm:$0xff] %v1517
      %1522 = vst [vmem:[%s226 + $0x8] sm:$0xff] %v1519
      %s1523 = smul.u32 2, %s16
      %p1524 = scmp.lt.s32.totalorder %s1523, 3
      %s1525 = scalar_select %p1524, %s1523, 3
      %s1526 = smul.addr %s1525, 8
      %s1527 = scalar_lea.vmem %s5, %s1526
      // Predicated region
      $region41: #{feature_extract_forward.1} parent=39 // pred_check
        %p1528 = pneg %p144
      $region42: #{feature_extract_forward.1} parent=39 // pred_check_branch
        %1530 = sbr.rel (%p1528) target = $region44
      $region43: #{feature_extract_forward.1} parent=39 // pred_region
        %s1531 = smul.u32 2, %s16
      $region44: #{feature_extract_forward.1} parent=39 // pred_fallthru
        _
    $region40: #{feature_extract_forward.1} parent=5 // pred_fallthru
      _
    %p1532 = scmp.le.s32.totalorder 2, %s11
    // Predicated region
    $region45: #{feature_extract_forward.1} parent=5 // pred_check
      %p1533 = pneg %p1532
    $region46: #{feature_extract_forward.1} parent=5 // pred_check_branch
      %1535 = sbr.rel (%p1533) target = $region48
    $region47: #{feature_extract_forward.1} parent=5 // pred_region
      %s1536 = ssub.s32 %s11, 2
      // Predicated region
      $region49: #{feature_extract_forward.1} parent=47 // pred_check
        %p1537 = pneg %p150
      $region50: #{feature_extract_forward.1} parent=47 // pred_check_branch
        %1539 = sbr.rel (%p1537) target = $region52
      $region51: #{feature_extract_forward.1} parent=47 // pred_region
        %s1540 = smul.u32 2, %s17
        %p1541 = scmp.lt.s32.totalorder %s1540, 3
        %s1542 = scalar_select %p1541, %s1540, 3
        %s1543 = smul.addr %s1542, 8
        %s1544 = scalar_lea.vmem %s5, %s1543
      $region52: #{feature_extract_forward.1} parent=47 // pred_fallthru
        _
    $region48: #{feature_extract_forward.1} parent=5 // pred_fallthru
      _
  $region6: #{feature_extract_forward.1} parent=0 // loop_footer
    %s15 = sadd.s32 1, %s11
  $region7: #{feature_extract_forward.1} parent=0 // loop_footer_branch
    %10 = sbr.rel target = $region3
  $region8: #{feature_extract_forward.1} parent=0 // loop_exit
    _

</llo_original>
